<compile_context>
chip_gen: v6e
topology: v6e:2x2x1
jax: 0.10.0
libtpu: 0.0.40
codegen_flags: <defaults>
</compile_context>

<pallas_src>
import functools

import jax
import jax.numpy as jnp
from jax.experimental import pallas as pl
from jax.experimental.pallas import tpu as pltpu


# ------------------------------ fused kernel -------------------------------


def _apply_act(x, act):
    if act == "tanh":
        return jnp.tanh(x)
    if act == "relu":
        return jnp.maximum(x, 0.0)
    return x  # identity


def _fused_policy_kernel(obs_ref, mask_ref, wmat_ref, bvec_ref, out_ref,
                         h_acc_ref, *,
                         batch, seq_len, hidden, enc_plan, lstm_plan, dec_plan):
    """encoder MLP -> LSTM (time loop) -> decoder MLP -> masked_fill, in VMEM.

    obs_ref   : (T*B, ob_dim)        f32, TIME-MAJOR rows (row = t*B + b)
    mask_ref  : (T*B, avail_ac_dim)  f32 {0,1}, same row order
    wmat_ref  : (Rw, LANES)          bf16 packed weight matrices
    bvec_ref  : (Rb, LANES)          f32 packed biases
    out_ref   : (T*B, avail_ac_dim)  f32 masked logits, time-major rows
    h_acc_ref : (T*B, H)             f32 scratch, LSTM outputs, time-major rows
    *_plan    : static (row_off, in_dim, out_dim, bias_off, act) tuples
    """
    mdt = wmat_ref.dtype  # bf16 MXU operands, f32 accumulation

    def linear(x, plan):
        w_off, in_dim, out_dim, b_off, act = plan
        w = wmat_ref[w_off:w_off + in_dim, 0:out_dim]
        b = bvec_ref[b_off:b_off + 1, 0:out_dim]
        y = jnp.dot(x.astype(mdt), w, preferred_element_type=jnp.float32) + b
        return _apply_act(y, act)

    # ---- encoder MLP over all T*B rows (one matmul per layer) --------------
    x = obs_ref[...]
    for plan in enc_plan:
        x = linear(x, plan)

    # ---- LSTM: hoisted input projection + short per-step dependent chain ---
    ih_off, hh_off, bl_off = lstm_plan
    h4 = 4 * hidden
    w_ih = wmat_ref[ih_off:ih_off + hidden, 0:h4]        # (H, 4H), 'g' cols pre-scaled x2
    w_hh = wmat_ref[hh_off:hh_off + hidden, 0:h4]        # (H, 4H), 'g' cols pre-scaled x2
    b_l = bvec_ref[bl_off:bl_off + 1, 0:h4]              # (1, 4H)

    # One lane-dense (T*B, H) @ (H, 4H) matmul replaces T tiny K=2H matmuls.
    x_proj = jnp.dot(x.astype(mdt), w_ih,
                     preferred_element_type=jnp.float32) + b_l    # (T*B, 4H)

    # tanh(z) = 2*sigmoid(2z) - 1 on the 'g' lanes (weights pre-scaled by 2),
    # so one full-width sigmoid + one VPU fma covers all four gates.
    lane = jax.lax.broadcasted_iota(jnp.int32, (batch, h4), 1)
    is_g = (lane >= 2 * hidden) & (lane < 3 * hidden)
    g_mul = jnp.where(is_g, 2.0, 1.0).astype(jnp.float32)   # hoisted (no CSE in-loop)
    g_sub = jnp.where(is_g, 1.0, 0.0).astype(jnp.float32)

    h = jnp.zeros((batch, hidden), jnp.float32)
    c = jnp.zeros((batch, hidden), jnp.float32)
    # Static unroll: T is tiny & static; every slice below is static.
    for t in range(seq_len):
        xp_t = x_proj[t * batch:(t + 1) * batch, :]               # (B, 4H) contiguous rows
        gates = xp_t + jnp.dot(h.astype(mdt), w_hh,
                               preferred_element_type=jnp.float32)
        s = jax.nn.sigmoid(gates)                                 # single EUP pass
        gact = s * g_mul - g_sub                                  # tanh on 'g' lanes
        i_g = gact[:, 0 * hidden:1 * hidden]
        f_g = gact[:, 1 * hidden:2 * hidden]
        g_g = gact[:, 2 * hidden:3 * hidden]
        o_g = gact[:, 3 * hidden:4 * hidden]
        c = f_g * c + i_g * g_g
        h = o_g * jnp.tanh(c)
        h_acc_ref[t * batch:(t + 1) * batch, :] = h               # contiguous rows

    # ---- decoder MLP + masked_fill (single fused HBM write) ----------------
    y = h_acc_ref[...]                                            # (T*B, H)
    for plan in dec_plan:
        y = linear(y, plan)

    # masked_fill(action_mask == 0, -inf); '< 0.5' is exact for a {0,1} mask.
    out_ref[...] = jnp.where(mask_ref[...] < 0.5, jnp.float32(-jnp.inf), y)


# ------------------------- parameter construction --------------------------


def _uniform(key, shape, bound):
    return jax.random.uniform(key, shape, jnp.float32, -bound, bound)


def init_params(key, ob_dim, size, avail_ac_dim, enc_layers, dec_layers):
    """PyTorch-default U(-1/sqrt(fan_in), +) init; weights stored (in, out)."""
    params = {"encoder": [], "decoder": []}

    # encoder: n_layers x [Linear(in,size)+tanh], Linear(size,size)+relu
    dims = [ob_dim] + [size] * enc_layers + [size]
    acts = ["tanh"] * enc_layers + ["relu"]
    for li, act in enumerate(acts):
        key, kw, kb = jax.random.split(key, 3)
        bnd = 1.0 / float(dims[li]) ** 0.5
        params["encoder"].append(
            (_uniform(kw, (dims[li], dims[li + 1]), bnd),
             _uniform(kb, (1, dims[li + 1]), bnd), act))

    # LSTM(size, size): pre-transposed w_ih / w_hh (H, 4H); combined bias b_ih+b_hh
    bnd = 1.0 / float(size) ** 0.5
    key, k1, k2, k3, k4 = jax.random.split(key, 5)
    params["w_ih"] = _uniform(k1, (size, 4 * size), bnd)   # gate order i,f,g,o
    params["w_hh"] = _uniform(k2, (size, 4 * size), bnd)
    params["b_lstm"] = (_uniform(k3, (1, 4 * size), bnd)
                        + _uniform(k4, (1, 4 * size), bnd))

    # decoder: n_layers x [Linear(size,size)+tanh], Linear(size,avail)+identity
    dims = [size] + [size] * dec_layers + [avail_ac_dim]
    acts = ["tanh"] * dec_layers + ["identity"]
    for li, act in enumerate(acts):
        key, kw, kb = jax.random.split(key, 3)
        bnd = 1.0 / float(dims[li]) ** 0.5
        params["decoder"].append(
            (_uniform(kw, (dims[li], dims[li + 1]), bnd),
             _uniform(kb, (1, dims[li + 1]), bnd), act))
    return params


# --------------------------- weight packing (host) --------------------------


def _ceil_to(n, m):
    return ((n + m - 1) // m) * m


def _pack_params(params, hidden):
    """Collapse all weights into 2 packed VMEM buffers + static slicing plans.

    Matrices -> one (Rw, LANES) bf16 buffer (rows padded to the bf16 sublane
    tile of 16); biases -> one (Rb, LANES) f32 buffer (rows padded to 8).  The
    LSTM 'g' gate columns are pre-scaled by 2 (tanh(x) = 2*sigmoid(2x) - 1) so
    the kernel needs a single sigmoid per step.
    """
    enc, dec = params["encoder"], params["decoder"]
    g_scale = jnp.ones((4 * hidden,), jnp.float32
                       ).at[2 * hidden:3 * hidden].set(2.0)
    w_ih = params["w_ih"] * g_scale
    w_hh = params["w_hh"] * g_scale
    b_l = params["b_lstm"] * g_scale

    mats = [w for w, _, _ in enc] + [w_ih, w_hh] + [w for w, _, _ in dec]
    biases = [b for _, b, _ in enc] + [b_l] + [b for _, b, _ in dec]
    lanes = _ceil_to(max(a.shape[1] for a in mats + biases), 128)

    def pack(arrs, row_mult, dtype):
        offs, blocks, r0 = [], [], 0
        for a in arrs:
            offs.append(r0)
            rp = _ceil_to(a.shape[0], row_mult)
            blocks.append(jnp.pad(a.astype(dtype),
                                  ((0, rp - a.shape[0]),
                                   (0, lanes - a.shape[1]))))
            r0 += rp
        return jnp.concatenate(blocks, axis=0), offs

    wmat, w_offs = pack(mats, 16, jnp.bfloat16)   # bf16 sublane tile = 16 rows
    bvec, b_offs = pack(biases, 8, jnp.float32)   # f32 sublane tile = 8 rows

    ne = len(enc)
    enc_plan = tuple(
        (w_offs[i], enc[i][0].shape[0], enc[i][0].shape[1],
         b_offs[i], enc[i][2]) for i in range(ne))
    lstm_plan = (w_offs[ne], w_offs[ne + 1], b_offs[ne])
    dec_plan = tuple(
        (w_offs[ne + 2 + j], dec[j][0].shape[0], dec[j][0].shape[1],
         b_offs[ne + 1 + j], dec[j][2]) for j in range(len(dec)))
    return wmat, bvec, enc_plan, lstm_plan, dec_plan


# ------------------------------ forward pass -------------------------------


def rnn_policy_forward(obs, action_mask, params, ac_dim, avail_ac_dim):
    """obs: (B, T, ob_dim) f32; action_mask: (B, T, avail_ac_dim) f32 {0,1}.

    Returns the masked logits the PyTorch module wraps in Categorical, shaped
    (B*T, ac_dim, avail_ac_dim // ac_dim) with batch-first row order (b*T + t).
    """
    bsz, t, ob_dim = obs.shape
    hidden = params["w_ih"].shape[0]
    n = bsz * t

    # Time-major rows (row = t*B + b): per-timestep slices inside the kernel
    # are contiguous; the batch-first transpose happens once out here.
    obs_tm = obs.transpose(1, 0, 2).reshape(n, ob_dim)
    mask_tm = action_mask.transpose(1, 0, 2).reshape(n, avail_ac_dim)

    wmat, bvec, enc_plan, lstm_plan, dec_plan = _pack_params(params, hidden)

    kernel = functools.partial(
        _fused_policy_kernel,
        batch=bsz, seq_len=t, hidden=hidden,
        enc_plan=enc_plan, lstm_plan=lstm_plan, dec_plan=dec_plan)

    # Single grid-less pallas_call: 4 operands (obs, mask, packed weights,
    # packed biases) mapped whole into VMEM, one output writeback.
    masked_tm = pl.pallas_call(
        kernel,
        out_shape=jax.ShapeDtypeStruct((n, avail_ac_dim), jnp.float32),
        scratch_shapes=[pltpu.VMEM((n, hidden), jnp.float32)],
    )(obs_tm, mask_tm, wmat, bvec)

    # Back to batch-first row order, then .view(-1, ac_dim, avail//ac_dim).
    masked = masked_tm.reshape(t, bsz, avail_ac_dim).transpose(1, 0, 2)
    return masked.reshape(-1, ac_dim, avail_ac_dim // ac_dim)


# ---------------------------------- main -----------------------------------

if __name__ == "__main__":
    # hyperparameters implied by the module's __init__
    n_agents = 2
    layer_size_per_agent = 16
    size = layer_size_per_agent * n_agents   # 32
    ob_dim = 16
    ac_dim = 2
    avail_ac_dim = 8
    encoder_n_layers = 1
    decoder_n_layers = 1

    B, T = 2, 8

    key = jax.random.PRNGKey(0)
    kp, ko, km = jax.random.split(key, 3)

    params = init_params(kp, ob_dim, size, avail_ac_dim,
                         encoder_n_layers, decoder_n_layers)

    obs = jax.random.normal(ko, (B, T, ob_dim), dtype=jnp.float32)
    action_mask = (jax.random.uniform(km, (B, T, avail_ac_dim)) > 0.3
                   ).astype(jnp.float32)
    # guarantee at least one valid action per row (as a real env mask would)
    action_mask = action_mask.at[:, :, 0].set(1.0)

    logits = rnn_policy_forward(obs, action_mask, params, ac_dim, avail_ac_dim)
    logits = jax.block_until_ready(logits)

    assert logits.shape == (B * T, ac_dim, avail_ac_dim // ac_dim)
    assert logits.dtype == jnp.float32
    print("KERNEL_OK")
</pallas_src>

<mosaic_0001>
module attributes {stable_mosaic.version = 11 : i64} {
  func.func @_fused_policy_kernel(%arg0: memref<16x16xf32, #tpu.memory_space<vmem>>, %arg1: memref<16x8xf32, #tpu.memory_space<vmem>>, %arg2: memref<176x128xbf16, #tpu.memory_space<vmem>>, %arg3: memref<40x128xf32, #tpu.memory_space<vmem>>, %arg4: memref<16x8xf32, #tpu.memory_space<vmem>>, %arg5: memref<16x32xf32, #tpu.memory_space<vmem>>) attributes {dimension_semantics = [], scalar_prefetch = 0 : i64, scratch_operands = 1 : i64, tpu.core_type = #tpu.core_type<tc>} {
    %c0 = arith.constant 0 : index
    %c0_0 = arith.constant 0 : index
    %0 = vector.load %arg0[%c0, %c0_0] : memref<16x16xf32, #tpu.memory_space<vmem>>, vector<16x16xf32>
    %c0_1 = arith.constant 0 : index
    %c0_2 = arith.constant 0 : index
    %1 = vector.load %arg2[%c0_1, %c0_2] : memref<176x128xbf16, #tpu.memory_space<vmem>>, vector<16x32xbf16>
    %c0_3 = arith.constant 0 : index
    %c0_4 = arith.constant 0 : index
    %2 = vector.load %arg3[%c0_3, %c0_4] : memref<40x128xf32, #tpu.memory_space<vmem>>, vector<1x32xf32>
    %3 = arith.truncf %0 : vector<16x16xf32> to vector<16x16xbf16>
    %cst = arith.constant dense<0.000000e+00> : vector<16x32xf32>
    %4 = tpu.matmul %3, %1, %cst {dimension_numbers = #tpu.dot_dimension_numbers<[1], [0], [0], [1], [0, 0, 1, 1], [], []>} : vector<16x16xbf16>, vector<16x32xbf16>, vector<16x32xf32> -> vector<16x32xf32>
    %5 = vector.broadcast %2 : vector<1x32xf32> to vector<16x32xf32>
    %6 = arith.addf %4, %5 : vector<16x32xf32>
    %7 = math.tanh %6 : vector<16x32xf32>
    %c16 = arith.constant 16 : index
    %c0_5 = arith.constant 0 : index
    %8 = vector.load %arg2[%c16, %c0_5] : memref<176x128xbf16, #tpu.memory_space<vmem>>, vector<32x32xbf16>
    %c8 = arith.constant 8 : index
    %c0_6 = arith.constant 0 : index
    %9 = vector.load %arg3[%c8, %c0_6] : memref<40x128xf32, #tpu.memory_space<vmem>>, vector<1x32xf32>
    %10 = arith.truncf %7 : vector<16x32xf32> to vector<16x32xbf16>
    %cst_7 = arith.constant dense<0.000000e+00> : vector<16x32xf32>
    %11 = tpu.matmul %10, %8, %cst_7 {dimension_numbers = #tpu.dot_dimension_numbers<[1], [0], [0], [1], [0, 0, 1, 1], [], []>} : vector<16x32xbf16>, vector<32x32xbf16>, vector<16x32xf32> -> vector<16x32xf32>
    %12 = vector.broadcast %9 : vector<1x32xf32> to vector<16x32xf32>
    %13 = arith.addf %11, %12 : vector<16x32xf32>
    %cst_8 = arith.constant 0.000000e+00 : f32
    %14 = vector.broadcast %cst_8 : f32 to vector<16x32xf32>
    %15 = arith.maximumf %13, %14 : vector<16x32xf32>
    %c48 = arith.constant 48 : index
    %c0_9 = arith.constant 0 : index
    %16 = vector.load %arg2[%c48, %c0_9] : memref<176x128xbf16, #tpu.memory_space<vmem>>, vector<32x128xbf16>
    %c80 = arith.constant 80 : index
    %c0_10 = arith.constant 0 : index
    %17 = vector.load %arg2[%c80, %c0_10] : memref<176x128xbf16, #tpu.memory_space<vmem>>, vector<32x128xbf16>
    %c16_11 = arith.constant 16 : index
    %c0_12 = arith.constant 0 : index
    %18 = vector.load %arg3[%c16_11, %c0_12] : memref<40x128xf32, #tpu.memory_space<vmem>>, vector<1x128xf32>
    %19 = arith.truncf %15 : vector<16x32xf32> to vector<16x32xbf16>
    %cst_13 = arith.constant dense<0.000000e+00> : vector<16x128xf32>
    %20 = tpu.matmul %19, %16, %cst_13 {dimension_numbers = #tpu.dot_dimension_numbers<[1], [0], [0], [1], [0, 0, 1, 1], [], []>} : vector<16x32xbf16>, vector<32x128xbf16>, vector<16x128xf32> -> vector<16x128xf32>
    %21 = vector.broadcast %18 : vector<1x128xf32> to vector<16x128xf32>
    %22 = arith.addf %20, %21 : vector<16x128xf32>
    %23 = tpu.iota {dimensions = array<i32: 1>} : vector<2x128xi32>
    %c64_i32 = arith.constant 64 : i32
    %24 = vector.broadcast %c64_i32 : i32 to vector<2x128xi32>
    %25 = arith.cmpi sge, %23, %24 : vector<2x128xi32>
    %c96_i32 = arith.constant 96 : i32
    %26 = vector.broadcast %c96_i32 : i32 to vector<2x128xi32>
    %27 = arith.cmpi slt, %23, %26 : vector<2x128xi32>
    %28 = arith.andi %25, %27 : vector<2x128xi1>
    %cst_14 = arith.constant 2.000000e+00 : f32
    %cst_15 = arith.constant 1.000000e+00 : f32
    %29 = vector.broadcast %cst_14 : f32 to vector<2x128xf32>
    %30 = vector.broadcast %cst_15 : f32 to vector<2x128xf32>
    %31 = arith.select %28, %29, %30 : vector<2x128xi1>, vector<2x128xf32>
    %cst_16 = arith.constant 1.000000e+00 : f32
    %cst_17 = arith.constant 0.000000e+00 : f32
    %32 = vector.broadcast %cst_16 : f32 to vector<2x128xf32>
    %33 = vector.broadcast %cst_17 : f32 to vector<2x128xf32>
    %34 = arith.select %28, %32, %33 : vector<2x128xi1>, vector<2x128xf32>
    %cst_18 = arith.constant 0.000000e+00 : f32
    %35 = vector.broadcast %cst_18 : f32 to vector<2x32xf32>
    %cst_19 = arith.constant 0.000000e+00 : f32
    %36 = vector.broadcast %cst_19 : f32 to vector<2x32xf32>
    %37 = vector.extract_strided_slice %22 {offsets = [0, 0], sizes = [2, 128], strides = [1, 1]} : vector<16x128xf32> to vector<2x128xf32>
    %38 = arith.truncf %35 : vector<2x32xf32> to vector<2x32xbf16>
    %cst_20 = arith.constant dense<0.000000e+00> : vector<2x128xf32>
    %39 = tpu.matmul %38, %17, %cst_20 {dimension_numbers = #tpu.dot_dimension_numbers<[1], [0], [0], [1], [0, 0, 1, 1], [], []>} : vector<2x32xbf16>, vector<32x128xbf16>, vector<2x128xf32> -> vector<2x128xf32>
    %40 = arith.addf %37, %39 : vector<2x128xf32>
    %41 = arith.negf %40 : vector<2x128xf32>
    %42 = math.exp %41 : vector<2x128xf32>
    %cst_21 = arith.constant 1.000000e+00 : f32
    %43 = vector.broadcast %cst_21 : f32 to vector<2x128xf32>
    %44 = arith.addf %43, %42 : vector<2x128xf32>
    %45 = arith.divf %43, %44 : vector<2x128xf32>
    %46 = arith.mulf %45, %31 : vector<2x128xf32>
    %47 = arith.subf %46, %34 : vector<2x128xf32>
    %48 = vector.extract_strided_slice %47 {offsets = [0, 0], sizes = [2, 32], strides = [1, 1]} : vector<2x128xf32> to vector<2x32xf32>
    %49 = vector.extract_strided_slice %47 {offsets = [0, 32], sizes = [2, 32], strides = [1, 1]} : vector<2x128xf32> to vector<2x32xf32>
    %50 = vector.extract_strided_slice %47 {offsets = [0, 64], sizes = [2, 32], strides = [1, 1]} : vector<2x128xf32> to vector<2x32xf32>
    %51 = vector.extract_strided_slice %47 {offsets = [0, 96], sizes = [2, 32], strides = [1, 1]} : vector<2x128xf32> to vector<2x32xf32>
    %52 = arith.mulf %49, %36 : vector<2x32xf32>
    %53 = arith.mulf %48, %50 : vector<2x32xf32>
    %54 = arith.addf %52, %53 : vector<2x32xf32>
    %55 = math.tanh %54 : vector<2x32xf32>
    %56 = arith.mulf %51, %55 : vector<2x32xf32>
    %c0_22 = arith.constant 0 : index
    %c0_23 = arith.constant 0 : index
    %57 = vector.load %arg5[%c0_22, %c0_23] : memref<16x32xf32, #tpu.memory_space<vmem>>, vector<2x32xf32>
    tpu.vector_store %arg5[%c0_22, %c0_23], %56 {strides = array<i32>} : memref<16x32xf32, #tpu.memory_space<vmem>>, vector<2x32xf32>,
    %58 = vector.extract_strided_slice %22 {offsets = [2, 0], sizes = [2, 128], strides = [1, 1]} : vector<16x128xf32> to vector<2x128xf32>
    %59 = arith.truncf %56 : vector<2x32xf32> to vector<2x32xbf16>
    %cst_24 = arith.constant dense<0.000000e+00> : vector<2x128xf32>
    %60 = tpu.matmul %59, %17, %cst_24 {dimension_numbers = #tpu.dot_dimension_numbers<[1], [0], [0], [1], [0, 0, 1, 1], [], []>} : vector<2x32xbf16>, vector<32x128xbf16>, vector<2x128xf32> -> vector<2x128xf32>
    %61 = arith.addf %58, %60 : vector<2x128xf32>
    %62 = arith.negf %61 : vector<2x128xf32>
    %63 = math.exp %62 : vector<2x128xf32>
    %cst_25 = arith.constant 1.000000e+00 : f32
    %64 = vector.broadcast %cst_25 : f32 to vector<2x128xf32>
    %65 = arith.addf %64, %63 : vector<2x128xf32>
    %66 = arith.divf %64, %65 : vector<2x128xf32>
    %67 = arith.mulf %66, %31 : vector<2x128xf32>
    %68 = arith.subf %67, %34 : vector<2x128xf32>
    %69 = vector.extract_strided_slice %68 {offsets = [0, 0], sizes = [2, 32], strides = [1, 1]} : vector<2x128xf32> to vector<2x32xf32>
    %70 = vector.extract_strided_slice %68 {offsets = [0, 32], sizes = [2, 32], strides = [1, 1]} : vector<2x128xf32> to vector<2x32xf32>
    %71 = vector.extract_strided_slice %68 {offsets = [0, 64], sizes = [2, 32], strides = [1, 1]} : vector<2x128xf32> to vector<2x32xf32>
    %72 = vector.extract_strided_slice %68 {offsets = [0, 96], sizes = [2, 32], strides = [1, 1]} : vector<2x128xf32> to vector<2x32xf32>
    %73 = arith.mulf %70, %54 : vector<2x32xf32>
    %74 = arith.mulf %69, %71 : vector<2x32xf32>
    %75 = arith.addf %73, %74 : vector<2x32xf32>
    %76 = math.tanh %75 : vector<2x32xf32>
    %77 = arith.mulf %72, %76 : vector<2x32xf32>
    %c2 = arith.constant 2 : index
    %c0_26 = arith.constant 0 : index
    %78 = vector.load %arg5[%c2, %c0_26] : memref<16x32xf32, #tpu.memory_space<vmem>>, vector<2x32xf32>
    tpu.vector_store %arg5[%c2, %c0_26], %77 {strides = array<i32>} : memref<16x32xf32, #tpu.memory_space<vmem>>, vector<2x32xf32>,
    %79 = vector.extract_strided_slice %22 {offsets = [4, 0], sizes = [2, 128], strides = [1, 1]} : vector<16x128xf32> to vector<2x128xf32>
    %80 = arith.truncf %77 : vector<2x32xf32> to vector<2x32xbf16>
    %cst_27 = arith.constant dense<0.000000e+00> : vector<2x128xf32>
    %81 = tpu.matmul %80, %17, %cst_27 {dimension_numbers = #tpu.dot_dimension_numbers<[1], [0], [0], [1], [0, 0, 1, 1], [], []>} : vector<2x32xbf16>, vector<32x128xbf16>, vector<2x128xf32> -> vector<2x128xf32>
    %82 = arith.addf %79, %81 : vector<2x128xf32>
    %83 = arith.negf %82 : vector<2x128xf32>
    %84 = math.exp %83 : vector<2x128xf32>
    %cst_28 = arith.constant 1.000000e+00 : f32
    %85 = vector.broadcast %cst_28 : f32 to vector<2x128xf32>
    %86 = arith.addf %85, %84 : vector<2x128xf32>
    %87 = arith.divf %85, %86 : vector<2x128xf32>
    %88 = arith.mulf %87, %31 : vector<2x128xf32>
    %89 = arith.subf %88, %34 : vector<2x128xf32>
    %90 = vector.extract_strided_slice %89 {offsets = [0, 0], sizes = [2, 32], strides = [1, 1]} : vector<2x128xf32> to vector<2x32xf32>
    %91 = vector.extract_strided_slice %89 {offsets = [0, 32], sizes = [2, 32], strides = [1, 1]} : vector<2x128xf32> to vector<2x32xf32>
    %92 = vector.extract_strided_slice %89 {offsets = [0, 64], sizes = [2, 32], strides = [1, 1]} : vector<2x128xf32> to vector<2x32xf32>
    %93 = vector.extract_strided_slice %89 {offsets = [0, 96], sizes = [2, 32], strides = [1, 1]} : vector<2x128xf32> to vector<2x32xf32>
    %94 = arith.mulf %91, %75 : vector<2x32xf32>
    %95 = arith.mulf %90, %92 : vector<2x32xf32>
    %96 = arith.addf %94, %95 : vector<2x32xf32>
    %97 = math.tanh %96 : vector<2x32xf32>
    %98 = arith.mulf %93, %97 : vector<2x32xf32>
    %c4 = arith.constant 4 : index
    %c0_29 = arith.constant 0 : index
    %99 = vector.load %arg5[%c4, %c0_29] : memref<16x32xf32, #tpu.memory_space<vmem>>, vector<2x32xf32>
    tpu.vector_store %arg5[%c4, %c0_29], %98 {strides = array<i32>} : memref<16x32xf32, #tpu.memory_space<vmem>>, vector<2x32xf32>,
    %100 = vector.extract_strided_slice %22 {offsets = [6, 0], sizes = [2, 128], strides = [1, 1]} : vector<16x128xf32> to vector<2x128xf32>
    %101 = arith.truncf %98 : vector<2x32xf32> to vector<2x32xbf16>
    %cst_30 = arith.constant dense<0.000000e+00> : vector<2x128xf32>
    %102 = tpu.matmul %101, %17, %cst_30 {dimension_numbers = #tpu.dot_dimension_numbers<[1], [0], [0], [1], [0, 0, 1, 1], [], []>} : vector<2x32xbf16>, vector<32x128xbf16>, vector<2x128xf32> -> vector<2x128xf32>
    %103 = arith.addf %100, %102 : vector<2x128xf32>
    %104 = arith.negf %103 : vector<2x128xf32>
    %105 = math.exp %104 : vector<2x128xf32>
    %cst_31 = arith.constant 1.000000e+00 : f32
    %106 = vector.broadcast %cst_31 : f32 to vector<2x128xf32>
    %107 = arith.addf %106, %105 : vector<2x128xf32>
    %108 = arith.divf %106, %107 : vector<2x128xf32>
    %109 = arith.mulf %108, %31 : vector<2x128xf32>
    %110 = arith.subf %109, %34 : vector<2x128xf32>
    %111 = vector.extract_strided_slice %110 {offsets = [0, 0], sizes = [2, 32], strides = [1, 1]} : vector<2x128xf32> to vector<2x32xf32>
    %112 = vector.extract_strided_slice %110 {offsets = [0, 32], sizes = [2, 32], strides = [1, 1]} : vector<2x128xf32> to vector<2x32xf32>
    %113 = vector.extract_strided_slice %110 {offsets = [0, 64], sizes = [2, 32], strides = [1, 1]} : vector<2x128xf32> to vector<2x32xf32>
    %114 = vector.extract_strided_slice %110 {offsets = [0, 96], sizes = [2, 32], strides = [1, 1]} : vector<2x128xf32> to vector<2x32xf32>
    %115 = arith.mulf %112, %96 : vector<2x32xf32>
    %116 = arith.mulf %111, %113 : vector<2x32xf32>
    %117 = arith.addf %115, %116 : vector<2x32xf32>
    %118 = math.tanh %117 : vector<2x32xf32>
    %119 = arith.mulf %114, %118 : vector<2x32xf32>
    %c6 = arith.constant 6 : index
    %c0_32 = arith.constant 0 : index
    %120 = vector.load %arg5[%c6, %c0_32] : memref<16x32xf32, #tpu.memory_space<vmem>>, vector<2x32xf32>
    tpu.vector_store %arg5[%c6, %c0_32], %119 {strides = array<i32>} : memref<16x32xf32, #tpu.memory_space<vmem>>, vector<2x32xf32>,
    %121 = vector.extract_strided_slice %22 {offsets = [8, 0], sizes = [2, 128], strides = [1, 1]} : vector<16x128xf32> to vector<2x128xf32>
    %122 = arith.truncf %119 : vector<2x32xf32> to vector<2x32xbf16>
    %cst_33 = arith.constant dense<0.000000e+00> : vector<2x128xf32>
    %123 = tpu.matmul %122, %17, %cst_33 {dimension_numbers = #tpu.dot_dimension_numbers<[1], [0], [0], [1], [0, 0, 1, 1], [], []>} : vector<2x32xbf16>, vector<32x128xbf16>, vector<2x128xf32> -> vector<2x128xf32>
    %124 = arith.addf %121, %123 : vector<2x128xf32>
    %125 = arith.negf %124 : vector<2x128xf32>
    %126 = math.exp %125 : vector<2x128xf32>
    %cst_34 = arith.constant 1.000000e+00 : f32
    %127 = vector.broadcast %cst_34 : f32 to vector<2x128xf32>
    %128 = arith.addf %127, %126 : vector<2x128xf32>
    %129 = arith.divf %127, %128 : vector<2x128xf32>
    %130 = arith.mulf %129, %31 : vector<2x128xf32>
    %131 = arith.subf %130, %34 : vector<2x128xf32>
    %132 = vector.extract_strided_slice %131 {offsets = [0, 0], sizes = [2, 32], strides = [1, 1]} : vector<2x128xf32> to vector<2x32xf32>
    %133 = vector.extract_strided_slice %131 {offsets = [0, 32], sizes = [2, 32], strides = [1, 1]} : vector<2x128xf32> to vector<2x32xf32>
    %134 = vector.extract_strided_slice %131 {offsets = [0, 64], sizes = [2, 32], strides = [1, 1]} : vector<2x128xf32> to vector<2x32xf32>
    %135 = vector.extract_strided_slice %131 {offsets = [0, 96], sizes = [2, 32], strides = [1, 1]} : vector<2x128xf32> to vector<2x32xf32>
    %136 = arith.mulf %133, %117 : vector<2x32xf32>
    %137 = arith.mulf %132, %134 : vector<2x32xf32>
    %138 = arith.addf %136, %137 : vector<2x32xf32>
    %139 = math.tanh %138 : vector<2x32xf32>
    %140 = arith.mulf %135, %139 : vector<2x32xf32>
    %c8_35 = arith.constant 8 : index
    %c0_36 = arith.constant 0 : index
    %141 = vector.load %arg5[%c8_35, %c0_36] : memref<16x32xf32, #tpu.memory_space<vmem>>, vector<2x32xf32>
    tpu.vector_store %arg5[%c8_35, %c0_36], %140 {strides = array<i32>} : memref<16x32xf32, #tpu.memory_space<vmem>>, vector<2x32xf32>,
    %142 = vector.extract_strided_slice %22 {offsets = [10, 0], sizes = [2, 128], strides = [1, 1]} : vector<16x128xf32> to vector<2x128xf32>
    %143 = arith.truncf %140 : vector<2x32xf32> to vector<2x32xbf16>
    %cst_37 = arith.constant dense<0.000000e+00> : vector<2x128xf32>
    %144 = tpu.matmul %143, %17, %cst_37 {dimension_numbers = #tpu.dot_dimension_numbers<[1], [0], [0], [1], [0, 0, 1, 1], [], []>} : vector<2x32xbf16>, vector<32x128xbf16>, vector<2x128xf32> -> vector<2x128xf32>
    %145 = arith.addf %142, %144 : vector<2x128xf32>
    %146 = arith.negf %145 : vector<2x128xf32>
    %147 = math.exp %146 : vector<2x128xf32>
    %cst_38 = arith.constant 1.000000e+00 : f32
    %148 = vector.broadcast %cst_38 : f32 to vector<2x128xf32>
    %149 = arith.addf %148, %147 : vector<2x128xf32>
    %150 = arith.divf %148, %149 : vector<2x128xf32>
    %151 = arith.mulf %150, %31 : vector<2x128xf32>
    %152 = arith.subf %151, %34 : vector<2x128xf32>
    %153 = vector.extract_strided_slice %152 {offsets = [0, 0], sizes = [2, 32], strides = [1, 1]} : vector<2x128xf32> to vector<2x32xf32>
    %154 = vector.extract_strided_slice %152 {offsets = [0, 32], sizes = [2, 32], strides = [1, 1]} : vector<2x128xf32> to vector<2x32xf32>
    %155 = vector.extract_strided_slice %152 {offsets = [0, 64], sizes = [2, 32], strides = [1, 1]} : vector<2x128xf32> to vector<2x32xf32>
    %156 = vector.extract_strided_slice %152 {offsets = [0, 96], sizes = [2, 32], strides = [1, 1]} : vector<2x128xf32> to vector<2x32xf32>
    %157 = arith.mulf %154, %138 : vector<2x32xf32>
    %158 = arith.mulf %153, %155 : vector<2x32xf32>
    %159 = arith.addf %157, %158 : vector<2x32xf32>
    %160 = math.tanh %159 : vector<2x32xf32>
    %161 = arith.mulf %156, %160 : vector<2x32xf32>
    %c10 = arith.constant 10 : index
    %c0_39 = arith.constant 0 : index
    %162 = vector.load %arg5[%c10, %c0_39] : memref<16x32xf32, #tpu.memory_space<vmem>>, vector<2x32xf32>
    tpu.vector_store %arg5[%c10, %c0_39], %161 {strides = array<i32>} : memref<16x32xf32, #tpu.memory_space<vmem>>, vector<2x32xf32>,
    %163 = vector.extract_strided_slice %22 {offsets = [12, 0], sizes = [2, 128], strides = [1, 1]} : vector<16x128xf32> to vector<2x128xf32>
    %164 = arith.truncf %161 : vector<2x32xf32> to vector<2x32xbf16>
    %cst_40 = arith.constant dense<0.000000e+00> : vector<2x128xf32>
    %165 = tpu.matmul %164, %17, %cst_40 {dimension_numbers = #tpu.dot_dimension_numbers<[1], [0], [0], [1], [0, 0, 1, 1], [], []>} : vector<2x32xbf16>, vector<32x128xbf16>, vector<2x128xf32> -> vector<2x128xf32>
    %166 = arith.addf %163, %165 : vector<2x128xf32>
    %167 = arith.negf %166 : vector<2x128xf32>
    %168 = math.exp %167 : vector<2x128xf32>
    %cst_41 = arith.constant 1.000000e+00 : f32
    %169 = vector.broadcast %cst_41 : f32 to vector<2x128xf32>
    %170 = arith.addf %169, %168 : vector<2x128xf32>
    %171 = arith.divf %169, %170 : vector<2x128xf32>
    %172 = arith.mulf %171, %31 : vector<2x128xf32>
    %173 = arith.subf %172, %34 : vector<2x128xf32>
    %174 = vector.extract_strided_slice %173 {offsets = [0, 0], sizes = [2, 32], strides = [1, 1]} : vector<2x128xf32> to vector<2x32xf32>
    %175 = vector.extract_strided_slice %173 {offsets = [0, 32], sizes = [2, 32], strides = [1, 1]} : vector<2x128xf32> to vector<2x32xf32>
    %176 = vector.extract_strided_slice %173 {offsets = [0, 64], sizes = [2, 32], strides = [1, 1]} : vector<2x128xf32> to vector<2x32xf32>
    %177 = vector.extract_strided_slice %173 {offsets = [0, 96], sizes = [2, 32], strides = [1, 1]} : vector<2x128xf32> to vector<2x32xf32>
    %178 = arith.mulf %175, %159 : vector<2x32xf32>
    %179 = arith.mulf %174, %176 : vector<2x32xf32>
    %180 = arith.addf %178, %179 : vector<2x32xf32>
    %181 = math.tanh %180 : vector<2x32xf32>
    %182 = arith.mulf %177, %181 : vector<2x32xf32>
    %c12 = arith.constant 12 : index
    %c0_42 = arith.constant 0 : index
    %183 = vector.load %arg5[%c12, %c0_42] : memref<16x32xf32, #tpu.memory_space<vmem>>, vector<2x32xf32>
    tpu.vector_store %arg5[%c12, %c0_42], %182 {strides = array<i32>} : memref<16x32xf32, #tpu.memory_space<vmem>>, vector<2x32xf32>,
    %184 = vector.extract_strided_slice %22 {offsets = [14, 0], sizes = [2, 128], strides = [1, 1]} : vector<16x128xf32> to vector<2x128xf32>
    %185 = arith.truncf %182 : vector<2x32xf32> to vector<2x32xbf16>
    %cst_43 = arith.constant dense<0.000000e+00> : vector<2x128xf32>
    %186 = tpu.matmul %185, %17, %cst_43 {dimension_numbers = #tpu.dot_dimension_numbers<[1], [0], [0], [1], [0, 0, 1, 1], [], []>} : vector<2x32xbf16>, vector<32x128xbf16>, vector<2x128xf32> -> vector<2x128xf32>
    %187 = arith.addf %184, %186 : vector<2x128xf32>
    %188 = arith.negf %187 : vector<2x128xf32>
    %189 = math.exp %188 : vector<2x128xf32>
    %cst_44 = arith.constant 1.000000e+00 : f32
    %190 = vector.broadcast %cst_44 : f32 to vector<2x128xf32>
    %191 = arith.addf %190, %189 : vector<2x128xf32>
    %192 = arith.divf %190, %191 : vector<2x128xf32>
    %193 = arith.mulf %192, %31 : vector<2x128xf32>
    %194 = arith.subf %193, %34 : vector<2x128xf32>
    %195 = vector.extract_strided_slice %194 {offsets = [0, 0], sizes = [2, 32], strides = [1, 1]} : vector<2x128xf32> to vector<2x32xf32>
    %196 = vector.extract_strided_slice %194 {offsets = [0, 32], sizes = [2, 32], strides = [1, 1]} : vector<2x128xf32> to vector<2x32xf32>
    %197 = vector.extract_strided_slice %194 {offsets = [0, 64], sizes = [2, 32], strides = [1, 1]} : vector<2x128xf32> to vector<2x32xf32>
    %198 = vector.extract_strided_slice %194 {offsets = [0, 96], sizes = [2, 32], strides = [1, 1]} : vector<2x128xf32> to vector<2x32xf32>
    %199 = arith.mulf %196, %180 : vector<2x32xf32>
    %200 = arith.mulf %195, %197 : vector<2x32xf32>
    %201 = arith.addf %199, %200 : vector<2x32xf32>
    %202 = math.tanh %201 : vector<2x32xf32>
    %203 = arith.mulf %198, %202 : vector<2x32xf32>
    %c14 = arith.constant 14 : index
    %c0_45 = arith.constant 0 : index
    %204 = vector.load %arg5[%c14, %c0_45] : memref<16x32xf32, #tpu.memory_space<vmem>>, vector<2x32xf32>
    tpu.vector_store %arg5[%c14, %c0_45], %203 {strides = array<i32>} : memref<16x32xf32, #tpu.memory_space<vmem>>, vector<2x32xf32>,
    %c0_46 = arith.constant 0 : index
    %c0_47 = arith.constant 0 : index
    %205 = vector.load %arg5[%c0_46, %c0_47] : memref<16x32xf32, #tpu.memory_space<vmem>>, vector<16x32xf32>
    %c112 = arith.constant 112 : index
    %c0_48 = arith.constant 0 : index
    %206 = vector.load %arg2[%c112, %c0_48] : memref<176x128xbf16, #tpu.memory_space<vmem>>, vector<32x32xbf16>
    %c24 = arith.constant 24 : index
    %c0_49 = arith.constant 0 : index
    %207 = vector.load %arg3[%c24, %c0_49] : memref<40x128xf32, #tpu.memory_space<vmem>>, vector<1x32xf32>
    %208 = arith.truncf %205 : vector<16x32xf32> to vector<16x32xbf16>
    %cst_50 = arith.constant dense<0.000000e+00> : vector<16x32xf32>
    %209 = tpu.matmul %208, %206, %cst_50 {dimension_numbers = #tpu.dot_dimension_numbers<[1], [0], [0], [1], [0, 0, 1, 1], [], []>} : vector<16x32xbf16>, vector<32x32xbf16>, vector<16x32xf32> -> vector<16x32xf32>
    %210 = vector.broadcast %207 : vector<1x32xf32> to vector<16x32xf32>
    %211 = arith.addf %209, %210 : vector<16x32xf32>
    %212 = math.tanh %211 : vector<16x32xf32>
    %c144 = arith.constant 144 : index
    %c0_51 = arith.constant 0 : index
    %213 = vector.load %arg2[%c144, %c0_51] : memref<176x128xbf16, #tpu.memory_space<vmem>>, vector<32x8xbf16>
    %c32 = arith.constant 32 : index
    %c0_52 = arith.constant 0 : index
    %214 = vector.load %arg3[%c32, %c0_52] : memref<40x128xf32, #tpu.memory_space<vmem>>, vector<1x8xf32>
    %215 = arith.truncf %212 : vector<16x32xf32> to vector<16x32xbf16>
    %cst_53 = arith.constant dense<0.000000e+00> : vector<16x8xf32>
    %216 = tpu.matmul %215, %213, %cst_53 {dimension_numbers = #tpu.dot_dimension_numbers<[1], [0], [0], [1], [0, 0, 1, 1], [], []>} : vector<16x32xbf16>, vector<32x8xbf16>, vector<16x8xf32> -> vector<16x8xf32>
    %217 = vector.broadcast %214 : vector<1x8xf32> to vector<16x8xf32>
    %218 = arith.addf %216, %217 : vector<16x8xf32>
    %c0_54 = arith.constant 0 : index
    %c0_55 = arith.constant 0 : index
    %219 = vector.load %arg1[%c0_54, %c0_55] : memref<16x8xf32, #tpu.memory_space<vmem>>, vector<16x8xf32>
    %cst_56 = arith.constant 5.000000e-01 : f32
    %220 = vector.broadcast %cst_56 : f32 to vector<16x8xf32>
    %221 = arith.cmpf olt, %219, %220 : vector<16x8xf32>
    %cst_57 = arith.constant 0xFF800000 : f32
    %222 = vector.broadcast %cst_57 : f32 to vector<16x8xf32>
    %223 = arith.select %221, %222, %218 : vector<16x8xi1>, vector<16x8xf32>
    %c0_58 = arith.constant 0 : index
    %c0_59 = arith.constant 0 : index
    %224 = vector.load %arg4[%c0_58, %c0_59] : memref<16x8xf32, #tpu.memory_space<vmem>>, vector<16x8xf32>
    tpu.vector_store %arg4[%c0_58, %c0_59], %223 {strides = array<i32>} : memref<16x8xf32, #tpu.memory_space<vmem>>, vector<16x8xf32>,
    return
  }
}

</mosaic_0001>

<llo_original>
// kernel: tpu_custom_call.1
$region0: #{tpu_custom_call.1}
  #allocation0 [shape = 'u32[]', space=smem, size = 0x4, offset = 0x4, fixed_abs, tag = 'smem constant byte address 0x4 - core index']
  #allocation1 [shape = 'u32[144,128]{1,0:T(1,128)}', space=vmem, size = 0x12000, scoped, tag = 'internal scratch']
  #allocation2 [shape = 'f32[16,32]{1,0:T(8,128)}', space=vmem, size = 0x2000, scoped, tag = 'scratch operand']
  %s0 = inlined_call_operand.vmem [shape: f32[16,16], index: 0, kind: input, shape index: {}]
  %s1 = inlined_call_operand.vmem [shape: f32[16,8], index: 1, kind: input, shape index: {}]
  %s2 = inlined_call_operand.hbm [shape: bf16[176,128], index: 2, kind: input, shape index: {}]
  %s3 = inlined_call_operand.hbm [shape: f32[40,128], index: 3, kind: input, shape index: {}]
  %s4 = inlined_call_operand.vmem [shape: f32[16,8], index: 4, kind: output, shape index: {}]
  %s5 = sld [smem:[#allocation0]]
  $region34: #{tpu_custom_call.1} parent=0
    _
  %s7 = ssub.s32 1, %s5
  %s8 = scalar_select 0, %s7, %s5
  $region1: #{tpu_custom_call.1} parent=0
    #allocation3 [shape = 'u8[45056]{0}', space=vmem, size = 0xb000, scoped, tag = 'input window, operand 2, single buffered']
    #allocation4 [shape = 's32[1]{0}', space=sflag, size = 0x4, scoped, tag = 'scoped memory for tpu_custom_call.1']
    #allocation5 [shape = 'u8[20480]{0}', space=vmem, size = 0x5000, scoped, tag = 'input window, operand 3, single buffered']
    #allocation6 [shape = 's32[1]{0}', space=sflag, size = 0x4, scoped, tag = 'scoped memory for tpu_custom_call.1']
    %9 = vsyncpa [#allocation4], 0
    %10 = vsyncpa [#allocation6], 0
    // Predicated region
    $region2: #{tpu_custom_call.1} parent=1 // pred_check
      _
    $region3: #{tpu_custom_call.1} parent=1 // pred_check_branch
      %12 = sbr.rel (0) target = $region5
    $region4: #{tpu_custom_call.1} parent=1 // pred_region
      _
    $region5: #{tpu_custom_call.1} parent=1 // pred_fallthru
      _
    // Predicated region
    $region6: #{tpu_custom_call.1} parent=1 // pred_check
      _
    $region7: #{tpu_custom_call.1} parent=1 // pred_check_branch
      %14 = sbr.rel (0) target = $region9
    $region8: #{tpu_custom_call.1} parent=1 // pred_region
      _
    $region9: #{tpu_custom_call.1} parent=1 // pred_fallthru
      _
    // Predicated region
    $region10: #{tpu_custom_call.1} parent=1 // pred_check
      _
    $region11: #{tpu_custom_call.1} parent=1 // pred_check_branch
      %16 = sbr.rel (0) target = $region13
    $region12: #{tpu_custom_call.1} parent=1 // pred_region
      %s18 = ssub.s32 1408, 1408
      %19 = vsyncadd [#allocation4], %s18
      %s20 = sshll.u32 [#allocation3], 4
      %s21 = int_to_ptr.vmem [resolvable:$true] %s20
      %26 = dma.hbm_to_vmem [thread:$0]  %s2, 1408, %s21, [#allocation4], 64, 64, 4
    $region13: #{tpu_custom_call.1} parent=1 // pred_fallthru
      _
    // Predicated region
    $region14: #{tpu_custom_call.1} parent=1 // pred_check
      _
    $region15: #{tpu_custom_call.1} parent=1 // pred_check_branch
      %28 = sbr.rel (0) target = $region17
    $region16: #{tpu_custom_call.1} parent=1 // pred_region
      %s30 = ssub.s32 640, 640
      %31 = vsyncadd [#allocation6], %s30
      %s32 = sshll.u32 [#allocation5], 4
      %s33 = int_to_ptr.vmem [resolvable:$true] %s32
      %38 = dma.hbm_to_vmem [thread:$0]  %s3, 640, %s33, [#allocation6], 128, 128, 8
    $region17: #{tpu_custom_call.1} parent=1 // pred_fallthru
      _
    // Predicated region
    $region18: #{tpu_custom_call.1} parent=1 // pred_check
      _
    $region19: #{tpu_custom_call.1} parent=1 // pred_check_branch
      %40 = sbr.rel (0) target = $region21
    $region20: #{tpu_custom_call.1} parent=1 // pred_region
      %41 = dma.done [#allocation4], 1408
    $region21: #{tpu_custom_call.1} parent=1 // pred_fallthru
      _
    // Predicated region
    $region22: #{tpu_custom_call.1} parent=1 // pred_check
      _
    $region23: #{tpu_custom_call.1} parent=1 // pred_check_branch
      %43 = sbr.rel (0) target = $region25
    $region24: #{tpu_custom_call.1} parent=1 // pred_region
      %44 = dma.done [#allocation6], 640
    $region25: #{tpu_custom_call.1} parent=1 // pred_fallthru
      _
    %v46 = vld [vmem:[%s0] sm:$0xff]
    %v47 = vld [vmem:[%s0 + $0x8] sm:$0xff]
    %v48 = vld [vmem:[#allocation3] sm:$0xf]
    %v49 = vld [vmem:[#allocation3 + $0x4] sm:$0xf]
    %v50 = vld [vmem:[#allocation5] sm:$0x1]
    %v51 = vpack.c.bf16 %v47, %v46
    %v52 = vlaneseq
    %v53 = vshrl.u32 %v52, 7
    %v54 = vsub.s32 0, %v53
    %v55 = vrot.slane %v50, %v54
    %v58 = vunpack.c.l.b16 %v48
    %v59 = vunpack.c.l.b16 %v49
    %v60 = vpack.c.b16 %v59, %v58
    %vm62 = vcmask 130048
    %v64 = vsel %vm62, %v51, 0
    %66 = vmatprep.subr.bf16.mxu0 0
    %67 = vmatpush1.bf16.msra.mxu0 0
    %68 = vmatprep.subr.bf16.mxu0 0
    %69 = vmatpush1.bf16.msra.mxu0 0
    %70 = vmatprep.subr.bf16.mxu0 0
    %71 = vmatpush1.bf16.msra.mxu0 0
    %72 = vmatprep.subr.bf16.mxu0 0
    %73 = vmatpush1.bf16.msra.mxu0 0
    %74 = vmatprep.subr.bf16.mxu0 0
    %75 = vmatpush1.bf16.msra.mxu0 0
    %76 = vmatprep.subr.bf16.mxu0 0
    %77 = vmatpush1.bf16.msra.mxu0 0
    %78 = vmatprep.subr.bf16.mxu0 0
    %79 = vmatpush1.bf16.msra.mxu0 0
    %80 = vmatprep.subr.bf16.mxu0 0
    %81 = vmatpush1.bf16.msra.mxu0 %v60
    %82 = vmatprep.subr.bf16.mxu0 0
    %83 = vmatpush2.bf16.msra.mxu0 0
    %84 = vmatprep.subr.bf16.mxu0 0
    %85 = vmatpush2.bf16.msra.mxu0 0
    %86 = vmatprep.subr.bf16.mxu0 0
    %87 = vmatpush2.bf16.msra.mxu0 0
    %88 = vmatprep.subr.bf16.mxu0 0
    %89 = vmatpush2.bf16.msra.mxu0 0
    %90 = vmatprep.subr.bf16.mxu0 0
    %91 = vmatpush2.bf16.msra.mxu0 0
    %92 = vmatprep.subr.bf16.mxu0 0
    %93 = vmatpush2.bf16.msra.mxu0 0
    %94 = vmatprep.subr.bf16.mxu0 0
    %95 = vmatpush2.bf16.msra.mxu0 0
    %96 = vmatprep.subr.bf16.mxu0 0
    %97 = vmatpush2.bf16.msra.mxu0 0
    %98 = vmatprep.mubr.bf16.mxu0 0
    %99 = vmatmul.mubr.bf16.gmra.mxu0 %v64
    %v100 = vpop.f32.mrf.mxu0
    %v101 = vadd.f32 %v55, %v100
    %v102 = vpop.f32.mrf.mxu0
    %v103 = vpop.f32.mrf.mxu0
    %v104 = vadd.f32 %v55, %v103
    %v105 = vpop.f32.mrf.mxu0
    %106 = vdwg.mxu0
    %v107 = vtanh.pop %v101
    %v108 = vtanh.pop %v104
    %v109 = vld [vmem:[#allocation3 + $0x8] sm:$0xf]
    %v110 = vld [vmem:[#allocation3 + $0xc] sm:$0xf]
    %v111 = vld [vmem:[#allocation3 + $0x10] sm:$0xf]
    %v112 = vld [vmem:[#allocation3 + $0x14] sm:$0xf]
    %v113 = vld [vmem:[#allocation5 + $0x8] sm:$0x1]
    %v114 = vpack.c.bf16 %v108, %v107
    %v115 = vlaneseq
    %v116 = vshrl.u32 %v115, 7
    %v117 = vsub.s32 0, %v116
    %v118 = vrot.slane %v113, %v117
    %v123 = vunpack.c.l.b16 %v109
    %v124 = vunpack.c.l.b16 %v110
    %v125 = vunpack.c.l.b16 %v111
    %v126 = vunpack.c.l.b16 %v112
    %v127 = vpack.c.b16 %v124, %v123
    %v128 = vpack.c.b16 %v126, %v125
    %vm131 = vcmask 261120
    %v133 = vsel %vm131, %v114, 0
    %135 = vmatprep.subr.bf16.mxu0 0
    %136 = vmatpush1.bf16.msra.mxu0 0
    %137 = vmatprep.subr.bf16.mxu0 0
    %138 = vmatpush1.bf16.msra.mxu0 0
    %139 = vmatprep.subr.bf16.mxu0 0
    %140 = vmatpush1.bf16.msra.mxu0 0
    %141 = vmatprep.subr.bf16.mxu0 0
    %142 = vmatpush1.bf16.msra.mxu0 0
    %143 = vmatprep.subr.bf16.mxu0 0
    %144 = vmatpush1.bf16.msra.mxu0 0
    %145 = vmatprep.subr.bf16.mxu0 0
    %146 = vmatpush1.bf16.msra.mxu0 0
    %147 = vmatprep.subr.bf16.mxu0 0
    %148 = vmatpush1.bf16.msra.mxu0 %v128
    %149 = vmatprep.subr.bf16.mxu0 0
    %150 = vmatpush1.bf16.msra.mxu0 %v127
    %151 = vmatprep.subr.bf16.mxu0 0
    %152 = vmatpush2.bf16.msra.mxu0 0
    %153 = vmatprep.subr.bf16.mxu0 0
    %154 = vmatpush2.bf16.msra.mxu0 0
    %155 = vmatprep.subr.bf16.mxu0 0
    %156 = vmatpush2.bf16.msra.mxu0 0
    %157 = vmatprep.subr.bf16.mxu0 0
    %158 = vmatpush2.bf16.msra.mxu0 0
    %159 = vmatprep.subr.bf16.mxu0 0
    %160 = vmatpush2.bf16.msra.mxu0 0
    %161 = vmatprep.subr.bf16.mxu0 0
    %162 = vmatpush2.bf16.msra.mxu0 0
    %163 = vmatprep.subr.bf16.mxu0 0
    %164 = vmatpush2.bf16.msra.mxu0 0
    %165 = vmatprep.subr.bf16.mxu0 0
    %166 = vmatpush2.bf16.msra.mxu0 0
    %167 = vmatprep.mubr.bf16.mxu0 0
    %168 = vmatmul.mubr.bf16.gmra.mxu0 %v133
    %v169 = vpop.f32.mrf.mxu0
    %v170 = vadd.f32 %v118, %v169
    %v171 = vpop.f32.mrf.mxu0
    %v172 = vpop.f32.mrf.mxu0
    %v173 = vadd.f32 %v118, %v172
    %v174 = vpop.f32.mrf.mxu0
    %175 = vdwg.mxu0
    %v176 = vmax.f32 %v170, 0.0
    %v177 = vmax.f32 %v173, 0.0
    %v178 = vld [vmem:[#allocation3 + $0x18] sm:$0xf]
    %v179 = vld [vmem:[#allocation3 + $0x1c] sm:$0xf]
    %v180 = vld [vmem:[#allocation3 + $0x20] sm:$0xf]
    %v181 = vld [vmem:[#allocation3 + $0x24] sm:$0xf]
    %v182 = vld [vmem:[#allocation3 + $0x28] sm:$0xf]
    %v183 = vld [vmem:[#allocation3 + $0x2c] sm:$0xf]
    %v184 = vld [vmem:[#allocation3 + $0x30] sm:$0xf]
    %v185 = vld [vmem:[#allocation3 + $0x34] sm:$0xf]
    %v186 = vld [vmem:[#allocation5 + $0x10] sm:$0x1]
    %v187 = vpack.c.bf16 %v177, %v176
    %v188 = vlaneseq
    %v189 = vshrl.u32 %v188, 7
    %v190 = vsub.s32 0, %v189
    %v191 = vrot.slane %v186, %v190
    %v196 = vunpack.c.l.b16 %v178
    %v197 = vunpack.c.l.b16 %v179
    %v198 = vunpack.c.l.b16 %v180
    %v199 = vunpack.c.l.b16 %v181
    %v200 = vpack.c.b16 %v197, %v196
    %v201 = vpack.c.b16 %v199, %v198
    %v205 = vsel %vm131, %v187, 0
    %207 = vmatprep.subr.bf16.mxu0 0
    %208 = vmatpush1.bf16.msra.mxu0 0
    %209 = vmatprep.subr.bf16.mxu0 0
    %210 = vmatpush1.bf16.msra.mxu0 0
    %211 = vmatprep.subr.bf16.mxu0 0
    %212 = vmatpush1.bf16.msra.mxu0 0
    %213 = vmatprep.subr.bf16.mxu0 0
    %214 = vmatpush1.bf16.msra.mxu0 0
    %215 = vmatprep.subr.bf16.mxu0 0
    %216 = vmatpush1.bf16.msra.mxu0 0
    %217 = vmatprep.subr.bf16.mxu0 0
    %218 = vmatpush1.bf16.msra.mxu0 0
    %219 = vmatprep.subr.bf16.mxu0 0
    %220 = vmatpush1.bf16.msra.mxu0 %v201
    %221 = vmatprep.subr.bf16.mxu0 0
    %222 = vmatpush1.bf16.msra.mxu0 %v200
    %223 = vmatprep.subr.bf16.mxu0 0
    %224 = vmatpush2.bf16.msra.mxu0 0
    %225 = vmatprep.subr.bf16.mxu0 0
    %226 = vmatpush2.bf16.msra.mxu0 0
    %227 = vmatprep.subr.bf16.mxu0 0
    %228 = vmatpush2.bf16.msra.mxu0 0
    %229 = vmatprep.subr.bf16.mxu0 0
    %230 = vmatpush2.bf16.msra.mxu0 0
    %231 = vmatprep.subr.bf16.mxu0 0
    %232 = vmatpush2.bf16.msra.mxu0 0
    %233 = vmatprep.subr.bf16.mxu0 0
    %234 = vmatpush2.bf16.msra.mxu0 0
    %235 = vmatprep.subr.bf16.mxu0 0
    %236 = vmatpush2.bf16.msra.mxu0 0
    %237 = vmatprep.subr.bf16.mxu0 0
    %238 = vmatpush2.bf16.msra.mxu0 0
    %239 = vmatprep.mubr.bf16.mxu0 0
    %240 = vmatmul.mubr.bf16.gmra.mxu0 %v205
    %v241 = vpop.f32.mrf.mxu0
    %v242 = vadd.f32 %v191, %v241
    %v243 = vpop.f32.mrf.mxu0
    %v244 = vpop.f32.mrf.mxu0
    %v245 = vadd.f32 %v191, %v244
    %v246 = vpop.f32.mrf.mxu0
    %247 = vdwg.mxu0
    %v248 = vlaneseq
    %v249 = vand.u32 %v248, 127
    %vm250 = vcmp.ge.s32.totalorder %v249, 64
    %vm251 = vcmp.lt.s32.totalorder %v249, 96
    %vm252 = vmand %vm250, %vm251
    %v253 = vsel %vm252, 2.0, 1.0
    %v254 = vsel %vm252, 1.0, 0.0
    %v259 = vunpack.c.l.b16 %v182
    %v260 = vunpack.c.l.b16 %v183
    %v261 = vunpack.c.l.b16 %v184
    %v262 = vunpack.c.l.b16 %v185
    %v263 = vpack.c.b16 %v260, %v259
    %v264 = vpack.c.b16 %v262, %v261
    %v268 = vsel %vm131, 0, 0
    %270 = vmatprep.subr.bf16.mxu0 0
    %271 = vmatpush1.bf16.msra.mxu0 0
    %272 = vmatprep.subr.bf16.mxu0 0
    %273 = vmatpush1.bf16.msra.mxu0 0
    %274 = vmatprep.subr.bf16.mxu0 0
    %275 = vmatpush1.bf16.msra.mxu0 0
    %276 = vmatprep.subr.bf16.mxu0 0
    %277 = vmatpush1.bf16.msra.mxu0 0
    %278 = vmatprep.subr.bf16.mxu0 0
    %279 = vmatpush1.bf16.msra.mxu0 0
    %280 = vmatprep.subr.bf16.mxu0 0
    %281 = vmatpush1.bf16.msra.mxu0 0
    %282 = vmatprep.subr.bf16.mxu0 0
    %283 = vmatpush1.bf16.msra.mxu0 %v264
    %284 = vmatprep.subr.bf16.mxu0 0
    %285 = vmatpush1.bf16.msra.mxu0 %v263
    %286 = vmatprep.subr.bf16.mxu0 0
    %287 = vmatpush2.bf16.msra.mxu0 0
    %288 = vmatprep.subr.bf16.mxu0 0
    %289 = vmatpush2.bf16.msra.mxu0 0
    %290 = vmatprep.subr.bf16.mxu0 0
    %291 = vmatpush2.bf16.msra.mxu0 0
    %292 = vmatprep.subr.bf16.mxu0 0
    %293 = vmatpush2.bf16.msra.mxu0 0
    %294 = vmatprep.subr.bf16.mxu0 0
    %295 = vmatpush2.bf16.msra.mxu0 0
    %296 = vmatprep.subr.bf16.mxu0 0
    %297 = vmatpush2.bf16.msra.mxu0 0
    %298 = vmatprep.subr.bf16.mxu0 0
    %299 = vmatpush2.bf16.msra.mxu0 0
    %300 = vmatprep.subr.bf16.mxu0 0
    %301 = vmatpush2.bf16.msra.mxu0 0
    %302 = vmatprep.mubr.bf16.mxu0 0
    %303 = vmatmul.mubr.bf16.gmra.mxu0 %v268
    %v304 = vpop.f32.mrf.mxu0
    %v305 = vadd.f32 0.0, %v304
    %v306 = vpop.f32.mrf.mxu0
    %v307 = vpop.f32.mrf.mxu0
    %v308 = vpop.f32.mrf.mxu0
    %309 = vdwg.mxu0
    %v310 = vadd.f32 %v242, %v305
    %v311 = vxor.u32 %v310, 2147483648
    %v312 = vmul.f32 %v311, 1.442695
    %v313 = vpow.pop %v312
    %v314 = vadd.f32 %v313, 1.0
    %v315 = vrcp.pop %v314
    %v316 = vmul.f32 1.0, %v315
    %v317 = vmul.f32 %v316, %v253
    %v318 = vsub.f32 %v317, %v254
    %v319 = vmul.f32 %v318, 0.0
    %321 = vrot.lane.b32.xlu0 %v318, 64
    %v322 = vpop.permute.xlu0 %321
    %v324 = vmul.f32 %v318, %v322
    %326 = vrot.lane.b32.xlu0 %v324, 32
    %v327 = vpop.permute.xlu0 %326
    %v329 = vadd.f32 %v319, %v327
    %v330 = vtanh.pop %v329
    %332 = vrot.lane.b32.xlu0 %v330, 64
    %v333 = vpop.permute.xlu0 %332
    %v335 = vmul.f32 %v318, %v333
    %337 = vrot.lane.b32.xlu0 %v335, 32
    %v338 = vpop.permute.xlu0 %337
    %vm340 = vcmask 254976
    %341 = vst.msk [vmem:[#allocation2] sm:$0x3] %vm340, %v338
    %v342 = vpack.c.bf16 %v335, %v335
    %344 = vrot.lane.b32.xlu0 %v342, 32
    %v345 = vpop.permute.xlu0 %344
    %v347 = vsel %vm131, %v345, 0
    %349 = vmatprep.subr.bf16.mxu0 0
    %350 = vmatpush1.bf16.msra.mxu0 0
    %351 = vmatprep.subr.bf16.mxu0 0
    %352 = vmatpush1.bf16.msra.mxu0 0
    %353 = vmatprep.subr.bf16.mxu0 0
    %354 = vmatpush1.bf16.msra.mxu0 0
    %355 = vmatprep.subr.bf16.mxu0 0
    %356 = vmatpush1.bf16.msra.mxu0 0
    %357 = vmatprep.subr.bf16.mxu0 0
    %358 = vmatpush1.bf16.msra.mxu0 0
    %359 = vmatprep.subr.bf16.mxu0 0
    %360 = vmatpush1.bf16.msra.mxu0 0
    %361 = vmatprep.subr.bf16.mxu0 0
    %362 = vmatpush1.bf16.msra.mxu0 %v264
    %363 = vmatprep.subr.bf16.mxu0 0
    %364 = vmatpush1.bf16.msra.mxu0 %v263
    %365 = vmatprep.subr.bf16.mxu0 0
    %366 = vmatpush2.bf16.msra.mxu0 0
    %367 = vmatprep.subr.bf16.mxu0 0
    %368 = vmatpush2.bf16.msra.mxu0 0
    %369 = vmatprep.subr.bf16.mxu0 0
    %370 = vmatpush2.bf16.msra.mxu0 0
    %371 = vmatprep.subr.bf16.mxu0 0
    %372 = vmatpush2.bf16.msra.mxu0 0
    %373 = vmatprep.subr.bf16.mxu0 0
    %374 = vmatpush2.bf16.msra.mxu0 0
    %375 = vmatprep.subr.bf16.mxu0 0
    %376 = vmatpush2.bf16.msra.mxu0 0
    %377 = vmatprep.subr.bf16.mxu0 0
    %378 = vmatpush2.bf16.msra.mxu0 0
    %379 = vmatprep.subr.bf16.mxu0 0
    %380 = vmatpush2.bf16.msra.mxu0 0
    %381 = vmatprep.mubr.bf16.mxu0 0
    %382 = vmatmul.mubr.bf16.gmra.mxu0 %v347
    %v383 = vpop.f32.mrf.mxu0
    %v384 = vadd.f32 0.0, %v383
    %v385 = vpop.f32.mrf.mxu0
    %v386 = vpop.f32.mrf.mxu0
    %v387 = vpop.f32.mrf.mxu0
    %388 = vdwg.mxu0
    %v390 = vrot.slane %v384, 6
    %v392 = vadd.f32 %v242, %v390
    %v393 = vxor.u32 %v392, 2147483648
    %v394 = vmul.f32 %v393, 1.442695
    %v395 = vpow.pop %v394
    %v396 = vadd.f32 %v395, 1.0
    %v397 = vrcp.pop %v396
    %v398 = vmul.f32 1.0, %v397
    %v399 = vmul.f32 %v398, %v253
    %v400 = vsub.f32 %v399, %v254
    %v402 = vrot.slane %v329, 6
    %v404 = vmul.f32 %v400, %v402
    %406 = vrot.lane.b32.xlu0 %v400, 64
    %v407 = vpop.permute.xlu0 %406
    %v409 = vmul.f32 %v400, %v407
    %411 = vrot.lane.b32.xlu0 %v409, 32
    %v412 = vpop.permute.xlu0 %411
    %v414 = vadd.f32 %v404, %v412
    %v415 = vtanh.pop %v414
    %417 = vrot.lane.b32.xlu0 %v415, 64
    %v418 = vpop.permute.xlu0 %417
    %v420 = vmul.f32 %v400, %v418
    %422 = vrot.lane.b32.xlu0 %v420, 32
    %v423 = vpop.permute.xlu0 %422
    %vm425 = vcmask 257026
    %426 = vst.msk [vmem:[#allocation2] sm:$0xc] %vm425, %v423
    %v427 = vpack.c.bf16 %v420, %v420
    %v429 = vrot.slane %v427, 1
    %430 = vrot.lane.b32.xlu0 %v429, 32
    %v431 = vpop.permute.xlu0 %430
    %v433 = vsel %vm131, %v431, 0
    %435 = vmatprep.subr.bf16.mxu0 0
    %436 = vmatpush1.bf16.msra.mxu0 0
    %437 = vmatprep.subr.bf16.mxu0 0
    %438 = vmatpush1.bf16.msra.mxu0 0
    %439 = vmatprep.subr.bf16.mxu0 0
    %440 = vmatpush1.bf16.msra.mxu0 0
    %441 = vmatprep.subr.bf16.mxu0 0
    %442 = vmatpush1.bf16.msra.mxu0 0
    %443 = vmatprep.subr.bf16.mxu0 0
    %444 = vmatpush1.bf16.msra.mxu0 0
    %445 = vmatprep.subr.bf16.mxu0 0
    %446 = vmatpush1.bf16.msra.mxu0 0
    %447 = vmatprep.subr.bf16.mxu0 0
    %448 = vmatpush1.bf16.msra.mxu0 %v264
    %449 = vmatprep.subr.bf16.mxu0 0
    %450 = vmatpush1.bf16.msra.mxu0 %v263
    %451 = vmatprep.subr.bf16.mxu0 0
    %452 = vmatpush2.bf16.msra.mxu0 0
    %453 = vmatprep.subr.bf16.mxu0 0
    %454 = vmatpush2.bf16.msra.mxu0 0
    %455 = vmatprep.subr.bf16.mxu0 0
    %456 = vmatpush2.bf16.msra.mxu0 0
    %457 = vmatprep.subr.bf16.mxu0 0
    %458 = vmatpush2.bf16.msra.mxu0 0
    %459 = vmatprep.subr.bf16.mxu0 0
    %460 = vmatpush2.bf16.msra.mxu0 0
    %461 = vmatprep.subr.bf16.mxu0 0
    %462 = vmatpush2.bf16.msra.mxu0 0
    %463 = vmatprep.subr.bf16.mxu0 0
    %464 = vmatpush2.bf16.msra.mxu0 0
    %465 = vmatprep.subr.bf16.mxu0 0
    %466 = vmatpush2.bf16.msra.mxu0 0
    %467 = vmatprep.mubr.bf16.mxu0 0
    %468 = vmatmul.mubr.bf16.gmra.mxu0 %v433
    %v469 = vpop.f32.mrf.mxu0
    %v470 = vadd.f32 0.0, %v469
    %v471 = vpop.f32.mrf.mxu0
    %v472 = vpop.f32.mrf.mxu0
    %v473 = vpop.f32.mrf.mxu0
    %474 = vdwg.mxu0
    %v476 = vrot.slane %v470, 4
    %v478 = vadd.f32 %v242, %v476
    %v479 = vxor.u32 %v478, 2147483648
    %v480 = vmul.f32 %v479, 1.442695
    %v481 = vpow.pop %v480
    %v482 = vadd.f32 %v481, 1.0
    %v483 = vrcp.pop %v482
    %v484 = vmul.f32 1.0, %v483
    %v485 = vmul.f32 %v484, %v253
    %v486 = vsub.f32 %v485, %v254
    %v488 = vrot.slane %v414, 6
    %v490 = vmul.f32 %v486, %v488
    %492 = vrot.lane.b32.xlu0 %v486, 64
    %v493 = vpop.permute.xlu0 %492
    %v495 = vmul.f32 %v486, %v493
    %497 = vrot.lane.b32.xlu0 %v495, 32
    %v498 = vpop.permute.xlu0 %497
    %v500 = vadd.f32 %v490, %v498
    %v501 = vtanh.pop %v500
    %503 = vrot.lane.b32.xlu0 %v501, 64
    %v504 = vpop.permute.xlu0 %503
    %v506 = vmul.f32 %v486, %v504
    %508 = vrot.lane.b32.xlu0 %v506, 32
    %v509 = vpop.permute.xlu0 %508
    %vm511 = vcmask 259076
    %512 = vst.msk [vmem:[#allocation2] sm:$0x30] %vm511, %v509
    %v513 = vpack.c.bf16 %v506, %v506
    %v515 = vrot.slane %v513, 2
    %516 = vrot.lane.b32.xlu0 %v515, 32
    %v517 = vpop.permute.xlu0 %516
    %v519 = vsel %vm131, %v517, 0
    %521 = vmatprep.subr.bf16.mxu0 0
    %522 = vmatpush1.bf16.msra.mxu0 0
    %523 = vmatprep.subr.bf16.mxu0 0
    %524 = vmatpush1.bf16.msra.mxu0 0
    %525 = vmatprep.subr.bf16.mxu0 0
    %526 = vmatpush1.bf16.msra.mxu0 0
    %527 = vmatprep.subr.bf16.mxu0 0
    %528 = vmatpush1.bf16.msra.mxu0 0
    %529 = vmatprep.subr.bf16.mxu0 0
    %530 = vmatpush1.bf16.msra.mxu0 0
    %531 = vmatprep.subr.bf16.mxu0 0
    %532 = vmatpush1.bf16.msra.mxu0 0
    %533 = vmatprep.subr.bf16.mxu0 0
    %534 = vmatpush1.bf16.msra.mxu0 %v264
    %535 = vmatprep.subr.bf16.mxu0 0
    %536 = vmatpush1.bf16.msra.mxu0 %v263
    %537 = vmatprep.subr.bf16.mxu0 0
    %538 = vmatpush2.bf16.msra.mxu0 0
    %539 = vmatprep.subr.bf16.mxu0 0
    %540 = vmatpush2.bf16.msra.mxu0 0
    %541 = vmatprep.subr.bf16.mxu0 0
    %542 = vmatpush2.bf16.msra.mxu0 0
    %543 = vmatprep.subr.bf16.mxu0 0
    %544 = vmatpush2.bf16.msra.mxu0 0
    %545 = vmatprep.subr.bf16.mxu0 0
    %546 = vmatpush2.bf16.msra.mxu0 0
    %547 = vmatprep.subr.bf16.mxu0 0
    %548 = vmatpush2.bf16.msra.mxu0 0
    %549 = vmatprep.subr.bf16.mxu0 0
    %550 = vmatpush2.bf16.msra.mxu0 0
    %551 = vmatprep.subr.bf16.mxu0 0
    %552 = vmatpush2.bf16.msra.mxu0 0
    %553 = vmatprep.mubr.bf16.mxu0 0
    %554 = vmatmul.mubr.bf16.gmra.mxu0 %v519
    %v555 = vpop.f32.mrf.mxu0
    %v556 = vadd.f32 0.0, %v555
    %v557 = vpop.f32.mrf.mxu0
    %v558 = vpop.f32.mrf.mxu0
    %v559 = vpop.f32.mrf.mxu0
    %560 = vdwg.mxu0
    %v562 = vrot.slane %v556, 2
    %v564 = vadd.f32 %v242, %v562
    %v565 = vxor.u32 %v564, 2147483648
    %v566 = vmul.f32 %v565, 1.442695
    %v567 = vpow.pop %v566
    %v568 = vadd.f32 %v567, 1.0
    %v569 = vrcp.pop %v568
    %v570 = vmul.f32 1.0, %v569
    %v571 = vmul.f32 %v570, %v253
    %v572 = vsub.f32 %v571, %v254
    %v574 = vrot.slane %v500, 6
    %v576 = vmul.f32 %v572, %v574
    %578 = vrot.lane.b32.xlu0 %v572, 64
    %v579 = vpop.permute.xlu0 %578
    %v581 = vmul.f32 %v572, %v579
    %583 = vrot.lane.b32.xlu0 %v581, 32
    %v584 = vpop.permute.xlu0 %583
    %v586 = vadd.f32 %v576, %v584
    %v587 = vtanh.pop %v586
    %589 = vrot.lane.b32.xlu0 %v587, 64
    %v590 = vpop.permute.xlu0 %589
    %v592 = vmul.f32 %v572, %v590
    %594 = vrot.lane.b32.xlu0 %v592, 32
    %v595 = vpop.permute.xlu0 %594
    %vm597 = vcmask 261126
    %598 = vst.msk [vmem:[#allocation2] sm:$0xc0] %vm597, %v595
    %v599 = vpack.c.bf16 %v592, %v592
    %v601 = vrot.slane %v599, 3
    %602 = vrot.lane.b32.xlu0 %v601, 32
    %v603 = vpop.permute.xlu0 %602
    %v605 = vsel %vm131, %v603, 0
    %607 = vmatprep.subr.bf16.mxu0 0
    %608 = vmatpush1.bf16.msra.mxu0 0
    %609 = vmatprep.subr.bf16.mxu0 0
    %610 = vmatpush1.bf16.msra.mxu0 0
    %611 = vmatprep.subr.bf16.mxu0 0
    %612 = vmatpush1.bf16.msra.mxu0 0
    %613 = vmatprep.subr.bf16.mxu0 0
    %614 = vmatpush1.bf16.msra.mxu0 0
    %615 = vmatprep.subr.bf16.mxu0 0
    %616 = vmatpush1.bf16.msra.mxu0 0
    %617 = vmatprep.subr.bf16.mxu0 0
    %618 = vmatpush1.bf16.msra.mxu0 0
    %619 = vmatprep.subr.bf16.mxu0 0
    %620 = vmatpush1.bf16.msra.mxu0 %v264
    %621 = vmatprep.subr.bf16.mxu0 0
    %622 = vmatpush1.bf16.msra.mxu0 %v263
    %623 = vmatprep.subr.bf16.mxu0 0
    %624 = vmatpush2.bf16.msra.mxu0 0
    %625 = vmatprep.subr.bf16.mxu0 0
    %626 = vmatpush2.bf16.msra.mxu0 0
    %627 = vmatprep.subr.bf16.mxu0 0
    %628 = vmatpush2.bf16.msra.mxu0 0
    %629 = vmatprep.subr.bf16.mxu0 0
    %630 = vmatpush2.bf16.msra.mxu0 0
    %631 = vmatprep.subr.bf16.mxu0 0
    %632 = vmatpush2.bf16.msra.mxu0 0
    %633 = vmatprep.subr.bf16.mxu0 0
    %634 = vmatpush2.bf16.msra.mxu0 0
    %635 = vmatprep.subr.bf16.mxu0 0
    %636 = vmatpush2.bf16.msra.mxu0 0
    %637 = vmatprep.subr.bf16.mxu0 0
    %638 = vmatpush2.bf16.msra.mxu0 0
    %639 = vmatprep.mubr.bf16.mxu0 0
    %640 = vmatmul.mubr.bf16.gmra.mxu0 %v605
    %v641 = vpop.f32.mrf.mxu0
    %v642 = vadd.f32 0.0, %v641
    %v643 = vpop.f32.mrf.mxu0
    %v644 = vpop.f32.mrf.mxu0
    %v645 = vpop.f32.mrf.mxu0
    %646 = vdwg.mxu0
    %v647 = vadd.f32 %v245, %v642
    %v648 = vxor.u32 %v647, 2147483648
    %v649 = vmul.f32 %v648, 1.442695
    %v650 = vpow.pop %v649
    %v651 = vadd.f32 %v650, 1.0
    %v652 = vrcp.pop %v651
    %v653 = vmul.f32 1.0, %v652
    %v654 = vmul.f32 %v653, %v253
    %v655 = vsub.f32 %v654, %v254
    %v657 = vrot.slane %v586, 6
    %v659 = vmul.f32 %v655, %v657
    %661 = vrot.lane.b32.xlu0 %v655, 64
    %v662 = vpop.permute.xlu0 %661
    %v664 = vmul.f32 %v655, %v662
    %666 = vrot.lane.b32.xlu0 %v664, 32
    %v667 = vpop.permute.xlu0 %666
    %v669 = vadd.f32 %v659, %v667
    %v670 = vtanh.pop %v669
    %672 = vrot.lane.b32.xlu0 %v670, 64
    %v673 = vpop.permute.xlu0 %672
    %v675 = vmul.f32 %v655, %v673
    %677 = vrot.lane.b32.xlu0 %v675, 32
    %v678 = vpop.permute.xlu0 %677
    %680 = vst.msk [vmem:[#allocation2 + $0x8] sm:$0x3] %vm340, %v678
    %v681 = vpack.c.bf16 %v675, %v675
    %683 = vrot.lane.b32.xlu0 %v681, 32
    %v684 = vpop.permute.xlu0 %683
    %v686 = vsel %vm131, %v684, 0
    %688 = vmatprep.subr.bf16.mxu0 0
    %689 = vmatpush1.bf16.msra.mxu0 0
    %690 = vmatprep.subr.bf16.mxu0 0
    %691 = vmatpush1.bf16.msra.mxu0 0
    %692 = vmatprep.subr.bf16.mxu0 0
    %693 = vmatpush1.bf16.msra.mxu0 0
    %694 = vmatprep.subr.bf16.mxu0 0
    %695 = vmatpush1.bf16.msra.mxu0 0
    %696 = vmatprep.subr.bf16.mxu0 0
    %697 = vmatpush1.bf16.msra.mxu0 0
    %698 = vmatprep.subr.bf16.mxu0 0
    %699 = vmatpush1.bf16.msra.mxu0 0
    %700 = vmatprep.subr.bf16.mxu0 0
    %701 = vmatpush1.bf16.msra.mxu0 %v264
    %702 = vmatprep.subr.bf16.mxu0 0
    %703 = vmatpush1.bf16.msra.mxu0 %v263
    %704 = vmatprep.subr.bf16.mxu0 0
    %705 = vmatpush2.bf16.msra.mxu0 0
    %706 = vmatprep.subr.bf16.mxu0 0
    %707 = vmatpush2.bf16.msra.mxu0 0
    %708 = vmatprep.subr.bf16.mxu0 0
    %709 = vmatpush2.bf16.msra.mxu0 0
    %710 = vmatprep.subr.bf16.mxu0 0
    %711 = vmatpush2.bf16.msra.mxu0 0
    %712 = vmatprep.subr.bf16.mxu0 0
    %713 = vmatpush2.bf16.msra.mxu0 0
    %714 = vmatprep.subr.bf16.mxu0 0
    %715 = vmatpush2.bf16.msra.mxu0 0
    %716 = vmatprep.subr.bf16.mxu0 0
    %717 = vmatpush2.bf16.msra.mxu0 0
    %718 = vmatprep.subr.bf16.mxu0 0
    %719 = vmatpush2.bf16.msra.mxu0 0
    %720 = vmatprep.mubr.bf16.mxu0 0
    %721 = vmatmul.mubr.bf16.gmra.mxu0 %v686
    %v722 = vpop.f32.mrf.mxu0
    %v723 = vadd.f32 0.0, %v722
    %v724 = vpop.f32.mrf.mxu0
    %v725 = vpop.f32.mrf.mxu0
    %v726 = vpop.f32.mrf.mxu0
    %727 = vdwg.mxu0
    %v729 = vrot.slane %v723, 6
    %v731 = vadd.f32 %v245, %v729
    %v732 = vxor.u32 %v731, 2147483648
    %v733 = vmul.f32 %v732, 1.442695
    %v734 = vpow.pop %v733
    %v735 = vadd.f32 %v734, 1.0
    %v736 = vrcp.pop %v735
    %v737 = vmul.f32 1.0, %v736
    %v738 = vmul.f32 %v737, %v253
    %v739 = vsub.f32 %v738, %v254
    %v741 = vrot.slane %v669, 6
    %v743 = vmul.f32 %v739, %v741
    %745 = vrot.lane.b32.xlu0 %v739, 64
    %v746 = vpop.permute.xlu0 %745
    %v748 = vmul.f32 %v739, %v746
    %750 = vrot.lane.b32.xlu0 %v748, 32
    %v751 = vpop.permute.xlu0 %750
    %v753 = vadd.f32 %v743, %v751
    %v754 = vtanh.pop %v753
    %756 = vrot.lane.b32.xlu0 %v754, 64
    %v757 = vpop.permute.xlu0 %756
    %v759 = vmul.f32 %v739, %v757
    %761 = vrot.lane.b32.xlu0 %v759, 32
    %v762 = vpop.permute.xlu0 %761
    %764 = vst.msk [vmem:[#allocation2 + $0x8] sm:$0xc] %vm425, %v762
    %v765 = vpack.c.bf16 %v759, %v759
    %v767 = vrot.slane %v765, 1
    %768 = vrot.lane.b32.xlu0 %v767, 32
    %v769 = vpop.permute.xlu0 %768
    %v771 = vsel %vm131, %v769, 0
    %773 = vmatprep.subr.bf16.mxu0 0
    %774 = vmatpush1.bf16.msra.mxu0 0
    %775 = vmatprep.subr.bf16.mxu0 0
    %776 = vmatpush1.bf16.msra.mxu0 0
    %777 = vmatprep.subr.bf16.mxu0 0
    %778 = vmatpush1.bf16.msra.mxu0 0
    %779 = vmatprep.subr.bf16.mxu0 0
    %780 = vmatpush1.bf16.msra.mxu0 0
    %781 = vmatprep.subr.bf16.mxu0 0
    %782 = vmatpush1.bf16.msra.mxu0 0
    %783 = vmatprep.subr.bf16.mxu0 0
    %784 = vmatpush1.bf16.msra.mxu0 0
    %785 = vmatprep.subr.bf16.mxu0 0
    %786 = vmatpush1.bf16.msra.mxu0 %v264
    %787 = vmatprep.subr.bf16.mxu0 0
    %788 = vmatpush1.bf16.msra.mxu0 %v263
    %789 = vmatprep.subr.bf16.mxu0 0
    %790 = vmatpush2.bf16.msra.mxu0 0
    %791 = vmatprep.subr.bf16.mxu0 0
    %792 = vmatpush2.bf16.msra.mxu0 0
    %793 = vmatprep.subr.bf16.mxu0 0
    %794 = vmatpush2.bf16.msra.mxu0 0
    %795 = vmatprep.subr.bf16.mxu0 0
    %796 = vmatpush2.bf16.msra.mxu0 0
    %797 = vmatprep.subr.bf16.mxu0 0
    %798 = vmatpush2.bf16.msra.mxu0 0
    %799 = vmatprep.subr.bf16.mxu0 0
    %800 = vmatpush2.bf16.msra.mxu0 0
    %801 = vmatprep.subr.bf16.mxu0 0
    %802 = vmatpush2.bf16.msra.mxu0 0
    %803 = vmatprep.subr.bf16.mxu0 0
    %804 = vmatpush2.bf16.msra.mxu0 0
    %805 = vmatprep.mubr.bf16.mxu0 0
    %806 = vmatmul.mubr.bf16.gmra.mxu0 %v771
    %v807 = vpop.f32.mrf.mxu0
    %v808 = vadd.f32 0.0, %v807
    %v809 = vpop.f32.mrf.mxu0
    %v810 = vpop.f32.mrf.mxu0
    %v811 = vpop.f32.mrf.mxu0
    %812 = vdwg.mxu0
    %v814 = vrot.slane %v808, 4
    %v816 = vadd.f32 %v245, %v814
    %v817 = vxor.u32 %v816, 2147483648
    %v818 = vmul.f32 %v817, 1.442695
    %v819 = vpow.pop %v818
    %v820 = vadd.f32 %v819, 1.0
    %v821 = vrcp.pop %v820
    %v822 = vmul.f32 1.0, %v821
    %v823 = vmul.f32 %v822, %v253
    %v824 = vsub.f32 %v823, %v254
    %v826 = vrot.slane %v753, 6
    %v828 = vmul.f32 %v824, %v826
    %830 = vrot.lane.b32.xlu0 %v824, 64
    %v831 = vpop.permute.xlu0 %830
    %v833 = vmul.f32 %v824, %v831
    %835 = vrot.lane.b32.xlu0 %v833, 32
    %v836 = vpop.permute.xlu0 %835
    %v838 = vadd.f32 %v828, %v836
    %v839 = vtanh.pop %v838
    %841 = vrot.lane.b32.xlu0 %v839, 64
    %v842 = vpop.permute.xlu0 %841
    %v844 = vmul.f32 %v824, %v842
    %846 = vrot.lane.b32.xlu0 %v844, 32
    %v847 = vpop.permute.xlu0 %846
    %849 = vst.msk [vmem:[#allocation2 + $0x8] sm:$0x30] %vm511, %v847
    %v850 = vpack.c.bf16 %v844, %v844
    %v852 = vrot.slane %v850, 2
    %853 = vrot.lane.b32.xlu0 %v852, 32
    %v854 = vpop.permute.xlu0 %853
    %v856 = vsel %vm131, %v854, 0
    %858 = vmatprep.subr.bf16.mxu0 0
    %859 = vmatpush1.bf16.msra.mxu0 0
    %860 = vmatprep.subr.bf16.mxu0 0
    %861 = vmatpush1.bf16.msra.mxu0 0
    %862 = vmatprep.subr.bf16.mxu0 0
    %863 = vmatpush1.bf16.msra.mxu0 0
    %864 = vmatprep.subr.bf16.mxu0 0
    %865 = vmatpush1.bf16.msra.mxu0 0
    %866 = vmatprep.subr.bf16.mxu0 0
    %867 = vmatpush1.bf16.msra.mxu0 0
    %868 = vmatprep.subr.bf16.mxu0 0
    %869 = vmatpush1.bf16.msra.mxu0 0
    %870 = vmatprep.subr.bf16.mxu0 0
    %871 = vmatpush1.bf16.msra.mxu0 %v264
    %872 = vmatprep.subr.bf16.mxu0 0
    %873 = vmatpush1.bf16.msra.mxu0 %v263
    %874 = vmatprep.subr.bf16.mxu0 0
    %875 = vmatpush2.bf16.msra.mxu0 0
    %876 = vmatprep.subr.bf16.mxu0 0
    %877 = vmatpush2.bf16.msra.mxu0 0
    %878 = vmatprep.subr.bf16.mxu0 0
    %879 = vmatpush2.bf16.msra.mxu0 0
    %880 = vmatprep.subr.bf16.mxu0 0
    %881 = vmatpush2.bf16.msra.mxu0 0
    %882 = vmatprep.subr.bf16.mxu0 0
    %883 = vmatpush2.bf16.msra.mxu0 0
    %884 = vmatprep.subr.bf16.mxu0 0
    %885 = vmatpush2.bf16.msra.mxu0 0
    %886 = vmatprep.subr.bf16.mxu0 0
    %887 = vmatpush2.bf16.msra.mxu0 0
    %888 = vmatprep.subr.bf16.mxu0 0
    %889 = vmatpush2.bf16.msra.mxu0 0
    %890 = vmatprep.mubr.bf16.mxu0 0
    %891 = vmatmul.mubr.bf16.gmra.mxu0 %v856
    %v892 = vpop.f32.mrf.mxu0
    %v893 = vadd.f32 0.0, %v892
    %v894 = vpop.f32.mrf.mxu0
    %v895 = vpop.f32.mrf.mxu0
    %v896 = vpop.f32.mrf.mxu0
    %897 = vdwg.mxu0
    %v899 = vrot.slane %v893, 2
    %v901 = vadd.f32 %v245, %v899
    %v902 = vxor.u32 %v901, 2147483648
    %v903 = vmul.f32 %v902, 1.442695
    %v904 = vpow.pop %v903
    %v905 = vadd.f32 %v904, 1.0
    %v906 = vrcp.pop %v905
    %v907 = vmul.f32 1.0, %v906
    %v908 = vmul.f32 %v907, %v253
    %v909 = vsub.f32 %v908, %v254
    %v911 = vrot.slane %v838, 6
    %v913 = vmul.f32 %v909, %v911
    %915 = vrot.lane.b32.xlu0 %v909, 64
    %v916 = vpop.permute.xlu0 %915
    %v918 = vmul.f32 %v909, %v916
    %920 = vrot.lane.b32.xlu0 %v918, 32
    %v921 = vpop.permute.xlu0 %920
    %v923 = vadd.f32 %v913, %v921
    %v924 = vtanh.pop %v923
    %926 = vrot.lane.b32.xlu0 %v924, 64
    %v927 = vpop.permute.xlu0 %926
    %v929 = vmul.f32 %v909, %v927
    %931 = vrot.lane.b32.xlu0 %v929, 32
    %v932 = vpop.permute.xlu0 %931
    %934 = vst.msk [vmem:[#allocation2 + $0x8] sm:$0xc0] %vm597, %v932
    %v935 = vld [vmem:[#allocation2] sm:$0xff]
    %v936 = vld [vmem:[#allocation2 + $0x8] sm:$0xff]
    %v937 = vld [vmem:[#allocation3 + $0x38] sm:$0xf]
    %v938 = vld [vmem:[#allocation3 + $0x3c] sm:$0xf]
    %v939 = vld [vmem:[#allocation3 + $0x40] sm:$0xf]
    %v940 = vld [vmem:[#allocation3 + $0x44] sm:$0xf]
    %v941 = vld [vmem:[#allocation5 + $0x18] sm:$0x1]
    %v942 = vpack.c.bf16 %v936, %v935
    %v943 = vlaneseq
    %v944 = vshrl.u32 %v943, 7
    %v945 = vsub.s32 0, %v944
    %v946 = vrot.slane %v941, %v945
    %v951 = vunpack.c.l.b16 %v937
    %v952 = vunpack.c.l.b16 %v938
    %v953 = vunpack.c.l.b16 %v939
    %v954 = vunpack.c.l.b16 %v940
    %v955 = vpack.c.b16 %v952, %v951
    %v956 = vpack.c.b16 %v954, %v953
    %v960 = vsel %vm131, %v942, 0
    %962 = vmatprep.subr.bf16.mxu0 0
    %963 = vmatpush1.bf16.msra.mxu0 0
    %964 = vmatprep.subr.bf16.mxu0 0
    %965 = vmatpush1.bf16.msra.mxu0 0
    %966 = vmatprep.subr.bf16.mxu0 0
    %967 = vmatpush1.bf16.msra.mxu0 0
    %968 = vmatprep.subr.bf16.mxu0 0
    %969 = vmatpush1.bf16.msra.mxu0 0
    %970 = vmatprep.subr.bf16.mxu0 0
    %971 = vmatpush1.bf16.msra.mxu0 0
    %972 = vmatprep.subr.bf16.mxu0 0
    %973 = vmatpush1.bf16.msra.mxu0 0
    %974 = vmatprep.subr.bf16.mxu0 0
    %975 = vmatpush1.bf16.msra.mxu0 %v956
    %976 = vmatprep.subr.bf16.mxu0 0
    %977 = vmatpush1.bf16.msra.mxu0 %v955
    %978 = vmatprep.subr.bf16.mxu0 0
    %979 = vmatpush2.bf16.msra.mxu0 0
    %980 = vmatprep.subr.bf16.mxu0 0
    %981 = vmatpush2.bf16.msra.mxu0 0
    %982 = vmatprep.subr.bf16.mxu0 0
    %983 = vmatpush2.bf16.msra.mxu0 0
    %984 = vmatprep.subr.bf16.mxu0 0
    %985 = vmatpush2.bf16.msra.mxu0 0
    %986 = vmatprep.subr.bf16.mxu0 0
    %987 = vmatpush2.bf16.msra.mxu0 0
    %988 = vmatprep.subr.bf16.mxu0 0
    %989 = vmatpush2.bf16.msra.mxu0 0
    %990 = vmatprep.subr.bf16.mxu0 0
    %991 = vmatpush2.bf16.msra.mxu0 0
    %992 = vmatprep.subr.bf16.mxu0 0
    %993 = vmatpush2.bf16.msra.mxu0 0
    %994 = vmatprep.mubr.bf16.mxu0 0
    %995 = vmatmul.mubr.bf16.gmra.mxu0 %v960
    %v996 = vpop.f32.mrf.mxu0
    %v997 = vadd.f32 %v946, %v996
    %v998 = vpop.f32.mrf.mxu0
    %v999 = vpop.f32.mrf.mxu0
    %v1000 = vadd.f32 %v946, %v999
    %v1001 = vpop.f32.mrf.mxu0
    %1002 = vdwg.mxu0
    %v1003 = vtanh.pop %v997
    %v1004 = vtanh.pop %v1000
    %v1005 = vld [vmem:[#allocation3 + $0x48] sm:$0xf]
    %v1006 = vld [vmem:[#allocation3 + $0x4c] sm:$0xf]
    %v1007 = vld [vmem:[#allocation3 + $0x50] sm:$0xf]
    %v1008 = vld [vmem:[#allocation3 + $0x54] sm:$0xf]
    %v1009 = vld [vmem:[#allocation5 + $0x20] sm:$0x1]
    %v1010 = vpack.c.bf16 %v1004, %v1003
    %v1011 = vlaneseq
    %v1012 = vshrl.u32 %v1011, 7
    %v1013 = vsub.s32 0, %v1012
    %v1014 = vrot.slane %v1009, %v1013
    %v1019 = vunpack.c.l.b16 %v1005
    %v1020 = vunpack.c.l.b16 %v1006
    %v1021 = vunpack.c.l.b16 %v1007
    %v1022 = vunpack.c.l.b16 %v1008
    %v1023 = vpack.c.b16 %v1020, %v1019
    %v1024 = vpack.c.b16 %v1022, %v1021
    %v1028 = vsel %vm131, %v1010, 0
    %1030 = vmatprep.subr.bf16.mxu0 0
    %1031 = vmatpush1.bf16.msra.mxu0 0
    %1032 = vmatprep.subr.bf16.mxu0 0
    %1033 = vmatpush1.bf16.msra.mxu0 0
    %1034 = vmatprep.subr.bf16.mxu0 0
    %1035 = vmatpush1.bf16.msra.mxu0 0
    %1036 = vmatprep.subr.bf16.mxu0 0
    %1037 = vmatpush1.bf16.msra.mxu0 0
    %1038 = vmatprep.subr.bf16.mxu0 0
    %1039 = vmatpush1.bf16.msra.mxu0 0
    %1040 = vmatprep.subr.bf16.mxu0 0
    %1041 = vmatpush1.bf16.msra.mxu0 0
    %1042 = vmatprep.subr.bf16.mxu0 0
    %1043 = vmatpush1.bf16.msra.mxu0 %v1024
    %1044 = vmatprep.subr.bf16.mxu0 0
    %1045 = vmatpush1.bf16.msra.mxu0 %v1023
    %1046 = vmatprep.subr.bf16.mxu0 0
    %1047 = vmatpush2.bf16.msra.mxu0 0
    %1048 = vmatprep.subr.bf16.mxu0 0
    %1049 = vmatpush2.bf16.msra.mxu0 0
    %1050 = vmatprep.subr.bf16.mxu0 0
    %1051 = vmatpush2.bf16.msra.mxu0 0
    %1052 = vmatprep.subr.bf16.mxu0 0
    %1053 = vmatpush2.bf16.msra.mxu0 0
    %1054 = vmatprep.subr.bf16.mxu0 0
    %1055 = vmatpush2.bf16.msra.mxu0 0
    %1056 = vmatprep.subr.bf16.mxu0 0
    %1057 = vmatpush2.bf16.msra.mxu0 0
    %1058 = vmatprep.subr.bf16.mxu0 0
    %1059 = vmatpush2.bf16.msra.mxu0 0
    %1060 = vmatprep.subr.bf16.mxu0 0
    %1061 = vmatpush2.bf16.msra.mxu0 0
    %1062 = vmatprep.mubr.bf16.mxu0 0
    %1063 = vmatmul.mubr.bf16.gmra.mxu0 %v1028
    %v1064 = vpop.f32.mrf.mxu0
    %v1065 = vadd.f32 %v1014, %v1064
    %v1066 = vpop.f32.mrf.mxu0
    %v1067 = vpop.f32.mrf.mxu0
    %v1068 = vadd.f32 %v1014, %v1067
    %v1069 = vpop.f32.mrf.mxu0
    %1070 = vdwg.mxu0
    %v1071 = vld [vmem:[%s1] sm:$0xff]
    %v1072 = vld [vmem:[%s1 + $0x8] sm:$0xff]
    %vm1073 = vcmp.lt.f32.partialorder %v1071, 0.5
    %vm1074 = vcmp.lt.f32.partialorder %v1072, 0.5
    %v1075 = vsel %vm1073, -inf, %v1065
    %v1076 = vsel %vm1074, -inf, %v1068
    %vm1077 = vcmask 64512
    %1078 = vst.msk [vmem:[%s4] sm:$0xff] %vm1077, %v1075
    %1079 = vst.msk [vmem:[%s4 + $0x8] sm:$0xff] %vm1077, %v1076
    // Predicated region
    $region26: #{tpu_custom_call.1} parent=1 // pred_check
      _
    $region27: #{tpu_custom_call.1} parent=1 // pred_check_branch
      %1081 = sbr.rel (0) target = $region29
    $region28: #{tpu_custom_call.1} parent=1 // pred_region
      _
    $region29: #{tpu_custom_call.1} parent=1 // pred_fallthru
      _
    // Predicated region
    $region30: #{tpu_custom_call.1} parent=1 // pred_check
      _
    $region31: #{tpu_custom_call.1} parent=1 // pred_check_branch
      %1083 = sbr.rel (0) target = $region33
    $region32: #{tpu_custom_call.1} parent=1 // pred_region
      _
    $region33: #{tpu_custom_call.1} parent=1 // pred_fallthru
      _
    %1084 = vsyncpa [#allocation4], 1
    %1085 = vsyncpa [#allocation6], 1

</llo_original>
